<compile_context>
chip_gen: v7x
topology: tpu7x:2x2x1
jax: 0.10.0
libtpu: 0.0.40
codegen_flags: <defaults>
</compile_context>

<pallas_src>
import numpy as np
import jax
import jax.numpy as jnp
from jax.experimental import pallas as pl
from jax.experimental.pallas import tpu as pltpu


def get_frequency_modes(seq_len, modes=64, mode_select_method='random'):
    modes = min(modes, seq_len // 2)
    if mode_select_method == 'random':
        index = list(range(0, seq_len // 2))
        np.random.shuffle(index)
        index = index[:modes]
    else:
        index = list(range(0, modes))
    index.sort()
    return index


def _r8(n):
    return ((n + 7) // 8) * 8


# ----------------------------------------------------------------------------- kernel

def _make_kernel(G, E, O, M, K, L, S, D, offs):
    (off_acat, off_aic2, off_fqre, off_fqim, off_irt, off_ntfw,
     off_wre, off_wim, off_sel) = offs
    GE, GS, GO = G * E, G * S, G * O
    f32 = jnp.float32

    def nn_(a, b):   # a @ b
        return jax.lax.dot_general(a, b, (((1,), (0,)), ((), ())),
                                   preferred_element_type=f32)

    def nt_(a, b):   # a @ b.T
        return jax.lax.dot_general(a, b, (((1,), (1,)), ((), ())),
                                   preferred_element_type=f32)

    def kernel(xq_ref, tfq_ref, xv_ref, c_ref, mm_ref, out_ref):
        xq = xq_ref[0]            # (L, G*E)  queries, (batch, head) packed in lanes
        tfq = tfq_ref[0]          # (L, G*E)
        xv = xv_ref[0]            # (S, G*D)

        acat = c_ref[off_acat:off_acat + 2 * K, 0:L]      # (2K, L) [cos; sin], DC zeroed
        aic2 = c_ref[off_aic2:off_aic2 + L, 0:2 * K]      # (L, 2K) [iDFT | iDFT]
        fqre = c_ref[off_fqre:off_fqre + M, 0:L]          # (M, L) selected-mode rfft (re)
        fqim = c_ref[off_fqim:off_fqim + M, 0:L]          # (M, L) selected-mode rfft (im)
        irt = c_ref[off_irt:off_irt + L, 0:2 * M]         # (L, 2M) irfft [re | im]
        ntw = c_ref[off_ntfw:off_ntfw + L, 0:1]           # (L, 1) scale * norm time weight
        nfw = c_ref[off_ntfw:off_ntfw + L, 1:2]           # (L, 1) scale * norm freq weight
        wre = mm_ref[off_wre:off_wre + M, :]              # (M, O*G*E) spectral weight (re)
        wim = mm_ref[off_wim:off_wim + M, :]              # (M, O*G*E) spectral weight (im)
        sel = mm_ref[off_sel:off_sel + GO, :]             # (G*O, O*G*E) 0/1 E-sum selector

        # ---- time branch: circular autocorrelation for every (b, h, e) column at
        #      once (Wiener-Khinchin as DFT matmuls); mean-centering folded into the
        #      zeroed-DC rows of acat; denominator read from lag 0 ----
        xcat = nn_(acat, xq)                              # (2K, GE)
        pwr = xcat * xcat                                 # |rfft(x - mean)|^2 (re/im split)
        corr_un = nn_(aic2, pwr)                          # (L, GE) unnormalized autocorr
        denom = corr_un[0:1, :]                           # lag-0 == sum((x - mean)^2)
        corr = corr_un * pl.reciprocal(denom, approx=True)

        # ---- frequency branch: selected rfft modes, complex per-mode weights
        #      (vectorized over all (b, h, e, o)), irfft of the mode-packed spectrum ----
        qre = nn_(fqre, xq)                               # (M, GE)
        qim = nn_(fqim, xq)
        qre_r = jnp.concatenate([qre] * O, axis=1)        # (M, O*GE) lane replication
        qim_r = jnp.concatenate([qim] * O, axis=1)
        prod = jnp.concatenate(
            [qre_r * wre - qim_r * wim,
             qre_r * wim + qim_r * wre], axis=0)          # (2M, O*GE)
        acc = nt_(prod, sel)                              # (2M, G*O)  sum over E
        out_f = nn_(irt, acc)                             # (L, G*O)   irfft

        # ---- attention: all (batch, head) groups batched into lane-dense matmuls
        #      via block-diagonal operands (sublane tile + 0/1 group mask) ----
        rg = jax.lax.broadcasted_iota(jnp.int32, (GS, GE), 0).astype(f32)
        cg = jax.lax.broadcasted_iota(jnp.int32, (GS, GE), 1).astype(f32)
        gmask = (jnp.floor((rg + 0.5) * (1.0 / S)) ==
                 jnp.floor((cg + 0.5) * (1.0 / E))).astype(f32)   # (GS, GE)

        ctile = jnp.concatenate([corr] * G, axis=0) * gmask       # (GS, GE) block-diag corr
        ttile = jnp.concatenate([tfq] * G, axis=0) * gmask        # (GS, GE) block-diag tf_q
        # mixed scores; softmax scale and normalized fusion weights pre-folded into ntw/nfw
        z = nt_(corr * ntw, ctile) + nt_(tfq * nfw, ttile)        # (L, G*S)
        # TODO(synk): softmax max-subtraction dropped (|z| << 1 since scale ~ 1e-3);
        # nn.Dropout(p=0.1) on the attention weights treated as identity (inference).
        ez = jnp.exp(z)
        den = nn_(ez, gmask)                              # (L, GE) per-group sums (E-replicated)
        vbd = jnp.concatenate([xv] * G, axis=0) * gmask   # (GS, G*D) block-diag values
        out_v = nn_(ez, vbd) * pl.reciprocal(den, approx=True)    # (L, G*D) softmax(z) @ V

        out_ref[0, :, :] = 0.5 * (out_v + out_f)          # single full-width store

    return kernel


# ----------------------------------------------------------------------------- wrapper

def mix_self_attention_pallas(tf_queries, queries, keys, values, mask,
                              time_w, freq_w, w1_re, w1_im,
                              index, in_channels, out_channels):
    # `keys` and `mask` are unused by the reference forward (kept for API parity).
    del keys, mask
    B, L, H, E = queries.shape
    _, S, _, D = values.shape
    O = out_channels // 8
    M = len(index)
    K = L // 2 + 1
    assert S == L, "self-attention path requires S == L"
    assert E == D == O, "module assumes in_channels == out_channels (E == D == O)"
    scale = 1.0 / (in_channels * out_channels)
    f32 = jnp.float32

    # ---- batch packing: put NB batch elements into the lane dimension so the whole
    #      forward is a single grid step for small shapes ----
    NB = B if (B * H * E <= 128 and B * H * S <= 512) else 1
    while B % NB:
        NB -= 1
    Bb = B // NB
    G = NB * H

    def pack(x, F):
        x = jnp.asarray(x, f32).reshape(Bb, NB, L, H, F)
        x = jnp.transpose(x, (0, 2, 1, 3, 4))
        return x.reshape(Bb, L, G * F)

    xq_p = pack(queries, E)
    tfq_p = pack(tf_queries, E)
    xv_p = pack(values, D)

    # ---- constant DFT / fusion-weight buffer (host side, one packed input) ----
    idx = np.asarray(index)
    lq = np.arange(L)
    kk = np.arange(K)

    ang = 2.0 * np.pi * np.outer(kk, lq) / L
    cosm = np.cos(ang)
    sinm = np.sin(ang)
    cosm[0, :] = 0.0                       # fold mean-centering: zero the DC bin
    sinm[0, :] = 0.0
    a_cat = np.concatenate([cosm, sinm], axis=0)                      # (2K, L)
    wk = np.where((kk == 0) | ((L % 2 == 0) & (kk == L // 2)), 1.0, 2.0) / L
    aic = wk[None, :] * np.cos(2.0 * np.pi * np.outer(lq, kk) / L)    # (L, K)
    aic2 = np.concatenate([aic, aic], axis=1)                         # (L, 2K)

    ang_q = 2.0 * np.pi * np.outer(idx, lq) / L
    fq_re = np.cos(ang_q)                                             # (M, L)
    fq_im = -np.sin(ang_q)

    mo = np.arange(M)
    wq = np.where((mo == 0) | ((L % 2 == 0) & (mo == L // 2)), 1.0, 2.0) / L
    ang_o = 2.0 * np.pi * np.outer(lq, mo) / L                        # (L, M)
    irt = np.concatenate([wq[None, :] * np.cos(ang_o),
                          -wq[None, :] * np.sin(ang_o)], axis=1)      # (L, 2M)

    tw = np.asarray(time_w, np.float64)
    fw = np.asarray(freq_w, np.float64)
    tot = tw + fw
    tot = tot + (tot == 0.0).astype(np.float64) * 1e-8
    ntfw = np.stack([scale * tw / tot, scale * fw / tot], axis=1)     # (L, 2)

    CW = _r8(max(2 * K, L, 2 * M, 2))
    off_acat = 0
    off_aic2 = off_acat + _r8(2 * K)
    off_fqre = off_aic2 + _r8(L)
    off_fqim = off_fqre + _r8(M)
    off_irt = off_fqim + _r8(M)
    off_ntfw = off_irt + _r8(L)
    NCR = off_ntfw + _r8(L)

    cpack_np = np.zeros((NCR, CW), np.float32)
    cpack_np[off_acat:off_acat + 2 * K, 0:L] = a_cat
    cpack_np[off_aic2:off_aic2 + L, 0:2 * K] = aic2
    cpack_np[off_fqre:off_fqre + M, 0:L] = fq_re
    cpack_np[off_fqim:off_fqim + M, 0:L] = fq_im
    cpack_np[off_irt:off_irt + L, 0:2 * M] = irt
    cpack_np[off_ntfw:off_ntfw + L, 0:2] = ntfw
    cpack = jnp.asarray(cpack_np)

    # ---- spectral weights (lane-dense, replicated over packed batch) + selector ----
    OGE = O * G * E
    GO = G * O

    def pack_w(w):
        w = np.asarray(w, np.float32)                        # (H, E, O, M)
        w = np.transpose(w, (3, 2, 0, 1))                    # (M, O, H, E)
        w = np.broadcast_to(w[:, :, None, :, :], (M, O, NB, H, E))
        return np.reshape(w, (M, OGE))                       # col = o*G*E + g*E + e

    wre_p = pack_w(w1_re)
    wim_p = pack_w(w1_im)

    sel_np = np.zeros((GO, OGE), np.float32)
    for g in range(G):
        for o in range(O):
            base = o * G * E + g * E
            sel_np[g * O + o, base:base + E] = 1.0

    off_wre = 0
    off_wim = off_wre + _r8(M)
    off_sel = off_wim + _r8(M)
    MMR = off_sel + GO
    mm_np = np.zeros((MMR, OGE), np.float32)
    mm_np[off_wre:off_wre + M] = wre_p
    mm_np[off_wim:off_wim + M] = wim_p
    mm_np[off_sel:off_sel + GO] = sel_np
    mm_pack = jnp.asarray(mm_np)

    kernel = _make_kernel(G, E, O, M, K, L, S, D,
                          (off_acat, off_aic2, off_fqre, off_fqim, off_irt,
                           off_ntfw, off_wre, off_wim, off_sel))

    bmap = lambda b: (b, 0, 0)
    cmap = lambda b: (0, 0)

    out = pl.pallas_call(
        kernel,
        out_shape=jax.ShapeDtypeStruct((Bb, L, GO), f32),
        grid=(Bb,),
        in_specs=[
            pl.BlockSpec((1, L, G * E), bmap),               # queries (packed)
            pl.BlockSpec((1, L, G * E), bmap),               # tf_queries (packed)
            pl.BlockSpec((1, S, G * D), bmap),               # values (packed)
            pl.BlockSpec((NCR, CW), cmap),                   # packed DFT / fusion constants
            pl.BlockSpec((MMR, OGE), cmap),                  # spectral weights + selector
        ],
        out_specs=pl.BlockSpec((1, L, GO), bmap),
        compiler_params=pltpu.CompilerParams(
            dimension_semantics=("parallel",)),
    )(xq_p, tfq_p, xv_p, cpack, mm_pack)

    # (Bb, L, NB*H*O) -> (B, H, O, L)   (module's native output layout)
    out = out.reshape(Bb, L, NB, H, O)
    out = jnp.transpose(out, (0, 2, 3, 4, 1)).reshape(B, H, O, L)
    return out


# ----------------------------------------------------------------------------- numpy reference (mirrors the torch module)

def reference_forward(tf_queries, queries, values, time_w, freq_w, w1,
                      index, in_channels, out_channels):
    tfq = np.asarray(tf_queries, np.float64)
    q = np.asarray(queries, np.float64)
    v = np.asarray(values, np.float64)
    tw = np.asarray(time_w, np.float64)
    fw = np.asarray(freq_w, np.float64)

    B, L, H, E = q.shape
    _, S, _, D = v.shape
    scale = 1.0 / (in_channels * out_channels)

    x = q.transpose(0, 2, 3, 1)              # (B,H,E,L)
    tf_q = tfq.transpose(0, 2, 3, 1)

    xc = x - x.mean(-1, keepdims=True)
    denom = (xc ** 2).sum(-1, keepdims=True)
    corr = np.zeros_like(x)
    for lag in range(L):
        shifted = np.concatenate([xc[..., lag:], xc[..., :lag]], axis=-1)
        corr[..., lag] = (xc * shifted).sum(-1) / denom[..., 0]

    scores = np.einsum('bhel,bhes->bhls', corr, corr)
    scores_tf = np.einsum('bhel,bhes->bhls', tf_q, tf_q)

    total = tw + fw
    total = total + (total == 0).astype(np.float64) * 1e-8
    mix = scores * (tw / total)[:, None] + scores_tf * (fw / total)[:, None]

    z = scale * mix
    z = z - z.max(-1, keepdims=True)
    ez = np.exp(z)
    attn = ez / ez.sum(-1, keepdims=True)

    x_ft = np.fft.rfft(x, axis=-1)                              # (B,H,E,K)
    out_ft = np.zeros((B, H, E, L // 2 + 1), dtype=np.complex128)
    for wi, i in enumerate(index):
        out_ft[:, :, :, wi] = np.einsum('bhi,hio->bho', x_ft[:, :, :, i], w1[:, :, :, wi])

    V = np.einsum('bhls,bshd->blhd', attn, v).transpose(0, 2, 3, 1)  # (B,H,D,L)
    xo = np.fft.irfft(out_ft, n=L, axis=-1)                          # (B,H,E,L)
    return (V + xo) / 2.0


# ----------------------------------------------------------------------------- main

if __name__ == "__main__":
    np.random.seed(0)
    B, H = 2, 8                      # weights1 has a hard-coded 8-head layout
    L = 16                           # seq_len (self-attention: S == L)
    S = 16
    in_channels = 32
    out_channels = 32
    E = in_channels // 8             # per-head query feature dim
    D = out_channels // 8            # per-head value feature dim
    modes = 6

    index = get_frequency_modes(L, modes=modes, mode_select_method='random')
    M = len(index)

    key = jax.random.PRNGKey(0)
    ks = jax.random.split(key, 8)
    w_scale = 1.0 / (in_channels * out_channels)
    time_w = jax.random.uniform(ks[0], (L,), jnp.float32)
    freq_w = jax.random.uniform(ks[1], (L,), jnp.float32)
    w1_re = w_scale * jax.random.uniform(ks[2], (8, in_channels // 8, out_channels // 8, M), jnp.float32)
    w1_im = w_scale * jax.random.uniform(ks[3], (8, in_channels // 8, out_channels // 8, M), jnp.float32)

    tf_queries = jax.random.normal(ks[4], (B, L, H, E), jnp.float32)
    queries = jax.random.normal(ks[5], (B, L, H, E), jnp.float32)
    keys = jax.random.normal(ks[6], (B, S, H, E), jnp.float32)   # unused by the forward
    values = jax.random.normal(ks[7], (B, S, H, D), jnp.float32)

    res = mix_self_attention_pallas(tf_queries, queries, keys, values, None,
                                    time_w, freq_w, w1_re, w1_im,
                                    index, in_channels, out_channels)
    res = jax.block_until_ready(res)

    w1 = np.asarray(w1_re, np.float64) + 1j * np.asarray(w1_im, np.float64)
    ref = reference_forward(np.asarray(tf_queries), np.asarray(queries),
                            np.asarray(values), np.asarray(time_w),
                            np.asarray(freq_w), w1, index,
                            in_channels, out_channels)

    np.testing.assert_allclose(np.asarray(res), ref, rtol=2e-2, atol=2e-2)
    print("KERNEL_OK")
</pallas_src>

<mosaic_0001>
module attributes {stable_mosaic.version = 11 : i64} {
  func.func @kernel(%arg0: i32, %arg1: memref<1x16x64xf32, #tpu.memory_space<vmem>>, %arg2: memref<1x16x64xf32, #tpu.memory_space<vmem>>, %arg3: memref<1x16x64xf32, #tpu.memory_space<vmem>>, %arg4: memref<88x24xf32, #tpu.memory_space<vmem>>, %arg5: memref<80x256xf32, #tpu.memory_space<vmem>>, %arg6: memref<1x16x64xf32, #tpu.memory_space<vmem>>) attributes {dimension_semantics = [#tpu.dimension_semantics<parallel>], iteration_bounds = array<i64: 1>, scalar_prefetch = 0 : i64, scratch_operands = 0 : i64, tpu.core_type = #tpu.core_type<tc>, window_params = [{transform_indices = @transform_0, window_bounds = array<i64: 1, 16, 64>}, {transform_indices = @transform_1, window_bounds = array<i64: 1, 16, 64>}, {transform_indices = @transform_2, window_bounds = array<i64: 1, 16, 64>}, {pipeline_mode = #tpu.pipeline_mode<synchronous>, transform_indices = @transform_3, window_bounds = array<i64: 88, 24>}, {pipeline_mode = #tpu.pipeline_mode<synchronous>, transform_indices = @transform_4, window_bounds = array<i64: 80, 256>}, {transform_indices = @transform_5, window_bounds = array<i64: 1, 16, 64>}]} {
    %c0 = arith.constant 0 : index
    %c0_0 = arith.constant 0 : index
    %c0_1 = arith.constant 0 : index
    %0 = vector.load %arg1[%c0, %c0_0, %c0_1] : memref<1x16x64xf32, #tpu.memory_space<vmem>>, vector<1x16x64xf32>
    %1 = vector.shape_cast %0 : vector<1x16x64xf32> to vector<16x64xf32>
    %c0_2 = arith.constant 0 : index
    %c0_3 = arith.constant 0 : index
    %c0_4 = arith.constant 0 : index
    %2 = vector.load %arg2[%c0_2, %c0_3, %c0_4] : memref<1x16x64xf32, #tpu.memory_space<vmem>>, vector<1x16x64xf32>
    %3 = vector.shape_cast %2 : vector<1x16x64xf32> to vector<16x64xf32>
    %c0_5 = arith.constant 0 : index
    %c0_6 = arith.constant 0 : index
    %c0_7 = arith.constant 0 : index
    %4 = vector.load %arg3[%c0_5, %c0_6, %c0_7] : memref<1x16x64xf32, #tpu.memory_space<vmem>>, vector<1x16x64xf32>
    %5 = vector.shape_cast %4 : vector<1x16x64xf32> to vector<16x64xf32>
    %c0_8 = arith.constant 0 : index
    %c0_9 = arith.constant 0 : index
    %6 = vector.load %arg4[%c0_8, %c0_9] : memref<88x24xf32, #tpu.memory_space<vmem>>, vector<18x16xf32>
    %c24 = arith.constant 24 : index
    %c0_10 = arith.constant 0 : index
    %7 = vector.load %arg4[%c24, %c0_10] : memref<88x24xf32, #tpu.memory_space<vmem>>, vector<16x18xf32>
    %c40 = arith.constant 40 : index
    %c0_11 = arith.constant 0 : index
    %8 = vector.load %arg4[%c40, %c0_11] : memref<88x24xf32, #tpu.memory_space<vmem>>, vector<6x16xf32>
    %c48 = arith.constant 48 : index
    %c0_12 = arith.constant 0 : index
    %9 = vector.load %arg4[%c48, %c0_12] : memref<88x24xf32, #tpu.memory_space<vmem>>, vector<6x16xf32>
    %c56 = arith.constant 56 : index
    %c0_13 = arith.constant 0 : index
    %10 = vector.load %arg4[%c56, %c0_13] : memref<88x24xf32, #tpu.memory_space<vmem>>, vector<16x12xf32>
    %c72 = arith.constant 72 : index
    %c0_14 = arith.constant 0 : index
    %11 = vector.load %arg4[%c72, %c0_14] : memref<88x24xf32, #tpu.memory_space<vmem>>, vector<16x1xf32>
    %c72_15 = arith.constant 72 : index
    %c1 = arith.constant 1 : index
    %12 = vector.load %arg4[%c72_15, %c1] : memref<88x24xf32, #tpu.memory_space<vmem>>, vector<16x1xf32>
    %c0_16 = arith.constant 0 : index
    %c0_17 = arith.constant 0 : index
    %13 = vector.load %arg5[%c0_16, %c0_17] : memref<80x256xf32, #tpu.memory_space<vmem>>, vector<6x256xf32>
    %c8 = arith.constant 8 : index
    %c0_18 = arith.constant 0 : index
    %14 = vector.load %arg5[%c8, %c0_18] : memref<80x256xf32, #tpu.memory_space<vmem>>, vector<6x256xf32>
    %c16 = arith.constant 16 : index
    %c0_19 = arith.constant 0 : index
    %15 = vector.load %arg5[%c16, %c0_19] : memref<80x256xf32, #tpu.memory_space<vmem>>, vector<64x256xf32>
    %cst = arith.constant dense<0.000000e+00> : vector<18x64xf32>
    %16 = tpu.matmul %6, %1, %cst {dimension_numbers = #tpu.dot_dimension_numbers<[1], [0], [0], [1], [0, 0, 1, 1], [], []>} : vector<18x16xf32>, vector<16x64xf32>, vector<18x64xf32> -> vector<18x64xf32>
    %17 = arith.mulf %16, %16 : vector<18x64xf32>
    %cst_20 = arith.constant dense<0.000000e+00> : vector<16x64xf32>
    %18 = tpu.matmul %7, %17, %cst_20 {dimension_numbers = #tpu.dot_dimension_numbers<[1], [0], [0], [1], [0, 0, 1, 1], [], []>} : vector<16x18xf32>, vector<18x64xf32>, vector<16x64xf32> -> vector<16x64xf32>
    %19 = vector.extract_strided_slice %18 {offsets = [0, 0], sizes = [1, 64], strides = [1, 1]} : vector<16x64xf32> to vector<1x64xf32>
    %20 = tpu.reciprocal %19 {approx = true} : vector<1x64xf32> -> vector<1x64xf32>
    %21 = vector.broadcast %20 : vector<1x64xf32> to vector<16x64xf32>
    %22 = arith.mulf %18, %21 : vector<16x64xf32>
    %cst_21 = arith.constant dense<0.000000e+00> : vector<6x64xf32>
    %23 = tpu.matmul %8, %1, %cst_21 {dimension_numbers = #tpu.dot_dimension_numbers<[1], [0], [0], [1], [0, 0, 1, 1], [], []>} : vector<6x16xf32>, vector<16x64xf32>, vector<6x64xf32> -> vector<6x64xf32>
    %cst_22 = arith.constant dense<0.000000e+00> : vector<6x64xf32>
    %24 = tpu.matmul %9, %1, %cst_22 {dimension_numbers = #tpu.dot_dimension_numbers<[1], [0], [0], [1], [0, 0, 1, 1], [], []>} : vector<6x16xf32>, vector<16x64xf32>, vector<6x64xf32> -> vector<6x64xf32>
    %25 = tpu.concatenate %23, %23, %23, %23 in 1 : vector<6x64xf32>, vector<6x64xf32>, vector<6x64xf32>, vector<6x64xf32> -> vector<6x256xf32>
    %26 = tpu.concatenate %24, %24, %24, %24 in 1 : vector<6x64xf32>, vector<6x64xf32>, vector<6x64xf32>, vector<6x64xf32> -> vector<6x256xf32>
    %27 = arith.mulf %25, %13 : vector<6x256xf32>
    %28 = arith.mulf %26, %14 : vector<6x256xf32>
    %29 = arith.subf %27, %28 : vector<6x256xf32>
    %30 = arith.mulf %25, %14 : vector<6x256xf32>
    %31 = arith.mulf %26, %13 : vector<6x256xf32>
    %32 = arith.addf %30, %31 : vector<6x256xf32>
    %33 = tpu.concatenate %29, %32 in 0 : vector<6x256xf32>, vector<6x256xf32> -> vector<12x256xf32>
    %cst_23 = arith.constant dense<0.000000e+00> : vector<12x64xf32>
    %34 = tpu.matmul %33, %15, %cst_23 {dimension_numbers = #tpu.dot_dimension_numbers<[1], [1], [0], [0], [0, 0, 1, 0], [], []>} : vector<12x256xf32>, vector<64x256xf32>, vector<12x64xf32> -> vector<12x64xf32>
    %cst_24 = arith.constant dense<0.000000e+00> : vector<16x64xf32>
    %35 = tpu.matmul %10, %34, %cst_24 {dimension_numbers = #tpu.dot_dimension_numbers<[1], [0], [0], [1], [0, 0, 1, 1], [], []>} : vector<16x12xf32>, vector<12x64xf32>, vector<16x64xf32> -> vector<16x64xf32>
    %36 = tpu.iota {dimensions = array<i32: 0>} : vector<256x64xi32>
    %37 = arith.sitofp %36 : vector<256x64xi32> to vector<256x64xf32>
    %38 = tpu.iota {dimensions = array<i32: 1>} : vector<256x64xi32>
    %39 = arith.sitofp %38 : vector<256x64xi32> to vector<256x64xf32>
    %cst_25 = arith.constant 5.000000e-01 : f32
    %40 = vector.broadcast %cst_25 : f32 to vector<256x64xf32>
    %41 = arith.addf %37, %40 : vector<256x64xf32>
    %cst_26 = arith.constant 6.250000e-02 : f32
    %42 = vector.broadcast %cst_26 : f32 to vector<256x64xf32>
    %43 = arith.mulf %41, %42 : vector<256x64xf32>
    %44 = math.floor %43 : vector<256x64xf32>
    %cst_27 = arith.constant 5.000000e-01 : f32
    %45 = vector.broadcast %cst_27 : f32 to vector<256x64xf32>
    %46 = arith.addf %39, %45 : vector<256x64xf32>
    %cst_28 = arith.constant 2.500000e-01 : f32
    %47 = vector.broadcast %cst_28 : f32 to vector<256x64xf32>
    %48 = arith.mulf %46, %47 : vector<256x64xf32>
    %49 = math.floor %48 : vector<256x64xf32>
    %50 = arith.cmpf oeq, %44, %49 : vector<256x64xf32>
    %51 = arith.extui %50 : vector<256x64xi1> to vector<256x64xi32>
    %52 = arith.sitofp %51 : vector<256x64xi32> to vector<256x64xf32>
    %53 = tpu.concatenate %22, %22, %22, %22, %22, %22, %22, %22, %22, %22, %22, %22, %22, %22, %22, %22 in 0 : vector<16x64xf32>, vector<16x64xf32>, vector<16x64xf32>, vector<16x64xf32>, vector<16x64xf32>, vector<16x64xf32>, vector<16x64xf32>, vector<16x64xf32>, vector<16x64xf32>, vector<16x64xf32>, vector<16x64xf32>, vector<16x64xf32>, vector<16x64xf32>, vector<16x64xf32>, vector<16x64xf32>, vector<16x64xf32> -> vector<256x64xf32>
    %54 = arith.mulf %53, %52 : vector<256x64xf32>
    %55 = tpu.concatenate %3, %3, %3, %3, %3, %3, %3, %3, %3, %3, %3, %3, %3, %3, %3, %3 in 0 : vector<16x64xf32>, vector<16x64xf32>, vector<16x64xf32>, vector<16x64xf32>, vector<16x64xf32>, vector<16x64xf32>, vector<16x64xf32>, vector<16x64xf32>, vector<16x64xf32>, vector<16x64xf32>, vector<16x64xf32>, vector<16x64xf32>, vector<16x64xf32>, vector<16x64xf32>, vector<16x64xf32>, vector<16x64xf32> -> vector<256x64xf32>
    %56 = arith.mulf %55, %52 : vector<256x64xf32>
    %57 = vector.broadcast %11 : vector<16x1xf32> to vector<16x64xf32>
    %58 = arith.mulf %22, %57 : vector<16x64xf32>
    %cst_29 = arith.constant dense<0.000000e+00> : vector<16x256xf32>
    %59 = tpu.matmul %58, %54, %cst_29 {dimension_numbers = #tpu.dot_dimension_numbers<[1], [1], [0], [0], [0, 0, 1, 0], [], []>} : vector<16x64xf32>, vector<256x64xf32>, vector<16x256xf32> -> vector<16x256xf32>
    %60 = vector.broadcast %12 : vector<16x1xf32> to vector<16x64xf32>
    %61 = arith.mulf %3, %60 : vector<16x64xf32>
    %cst_30 = arith.constant dense<0.000000e+00> : vector<16x256xf32>
    %62 = tpu.matmul %61, %56, %cst_30 {dimension_numbers = #tpu.dot_dimension_numbers<[1], [1], [0], [0], [0, 0, 1, 0], [], []>} : vector<16x64xf32>, vector<256x64xf32>, vector<16x256xf32> -> vector<16x256xf32>
    %63 = arith.addf %59, %62 : vector<16x256xf32>
    %64 = math.exp %63 : vector<16x256xf32>
    %cst_31 = arith.constant dense<0.000000e+00> : vector<16x64xf32>
    %65 = tpu.matmul %64, %52, %cst_31 {dimension_numbers = #tpu.dot_dimension_numbers<[1], [0], [0], [1], [0, 0, 1, 1], [], []>} : vector<16x256xf32>, vector<256x64xf32>, vector<16x64xf32> -> vector<16x64xf32>
    %66 = tpu.concatenate %5, %5, %5, %5, %5, %5, %5, %5, %5, %5, %5, %5, %5, %5, %5, %5 in 0 : vector<16x64xf32>, vector<16x64xf32>, vector<16x64xf32>, vector<16x64xf32>, vector<16x64xf32>, vector<16x64xf32>, vector<16x64xf32>, vector<16x64xf32>, vector<16x64xf32>, vector<16x64xf32>, vector<16x64xf32>, vector<16x64xf32>, vector<16x64xf32>, vector<16x64xf32>, vector<16x64xf32>, vector<16x64xf32> -> vector<256x64xf32>
    %67 = arith.mulf %66, %52 : vector<256x64xf32>
    %cst_32 = arith.constant dense<0.000000e+00> : vector<16x64xf32>
    %68 = tpu.matmul %64, %67, %cst_32 {dimension_numbers = #tpu.dot_dimension_numbers<[1], [0], [0], [1], [0, 0, 1, 1], [], []>} : vector<16x256xf32>, vector<256x64xf32>, vector<16x64xf32> -> vector<16x64xf32>
    %69 = tpu.reciprocal %65 {approx = true} : vector<16x64xf32> -> vector<16x64xf32>
    %70 = arith.mulf %68, %69 : vector<16x64xf32>
    %71 = arith.addf %70, %35 : vector<16x64xf32>
    %cst_33 = arith.constant 5.000000e-01 : f32
    %72 = vector.broadcast %cst_33 : f32 to vector<16x64xf32>
    %73 = arith.mulf %72, %71 : vector<16x64xf32>
    %c0_34 = arith.constant 0 : index
    %c0_35 = arith.constant 0 : index
    %c0_36 = arith.constant 0 : index
    %74 = vector.load %arg6[%c0_34, %c0_35, %c0_36] : memref<1x16x64xf32, #tpu.memory_space<vmem>>, vector<1x16x64xf32>
    %75 = vector.shape_cast %74 : vector<1x16x64xf32> to vector<16x64xf32>
    %76 = vector.shape_cast %73 : vector<16x64xf32> to vector<1x16x64xf32>
    tpu.vector_store %arg6[%c0_34, %c0_35, %c0_36], %76 {strides = array<i32>} : memref<1x16x64xf32, #tpu.memory_space<vmem>>, vector<1x16x64xf32>,
    return
  }
  func.func @transform_0(%arg0: i32) -> (i32, i32, i32) {
    %c0_i32 = arith.constant 0 : i32
    %c0_i32_0 = arith.constant 0 : i32
    %c0_i32_1 = arith.constant 0 : i32
    return %arg0, %c0_i32, %c0_i32_0 : i32, i32, i32
  }
  func.func @transform_1(%arg0: i32) -> (i32, i32, i32) {
    %c0_i32 = arith.constant 0 : i32
    %c0_i32_0 = arith.constant 0 : i32
    %c0_i32_1 = arith.constant 0 : i32
    return %arg0, %c0_i32, %c0_i32_0 : i32, i32, i32
  }
  func.func @transform_2(%arg0: i32) -> (i32, i32, i32) {
    %c0_i32 = arith.constant 0 : i32
    %c0_i32_0 = arith.constant 0 : i32
    %c0_i32_1 = arith.constant 0 : i32
    return %arg0, %c0_i32, %c0_i32_0 : i32, i32, i32
  }
  func.func @transform_3(%arg0: i32) -> (i32, i32) {
    %c0_i32 = arith.constant 0 : i32
    %c0_i32_0 = arith.constant 0 : i32
    %c0_i32_1 = arith.constant 0 : i32
    return %c0_i32, %c0_i32_0 : i32, i32
  }
  func.func @transform_4(%arg0: i32) -> (i32, i32) {
    %c0_i32 = arith.constant 0 : i32
    %c0_i32_0 = arith.constant 0 : i32
    %c0_i32_1 = arith.constant 0 : i32
    return %c0_i32, %c0_i32_0 : i32, i32
  }
  func.func @transform_5(%arg0: i32) -> (i32, i32, i32) {
    %c0_i32 = arith.constant 0 : i32
    %c0_i32_0 = arith.constant 0 : i32
    %c0_i32_1 = arith.constant 0 : i32
    return %arg0, %c0_i32, %c0_i32_0 : i32, i32, i32
  }
}

</mosaic_0001>

<llo_original>
// kernel: tpu_custom_call.1
$region0: #{tpu_custom_call.1}
  #allocation0 [shape = 'u32[]', space=smem, size = 0x4, offset = 0x4, fixed_abs, tag = 'smem constant byte address 0x4 - core index']
  #allocation1 [shape = 'u32[144,128]{1,0:T(1,128)}', space=vmem, size = 0x12000, scoped, tag = 'internal scratch']
  %s0 = inlined_call_operand.vmem [shape: f32[1,16,64], index: 0, kind: input, shape index: {}]
  %s1 = inlined_call_operand.vmem [shape: f32[1,16,64], index: 1, kind: input, shape index: {}]
  %s2 = inlined_call_operand.vmem [shape: f32[1,16,64], index: 2, kind: input, shape index: {}]
  %s3 = inlined_call_operand.vmem [shape: f32[88,24], index: 3, kind: input, shape index: {}]
  %s4 = inlined_call_operand.hbm [shape: f32[80,256], index: 4, kind: input, shape index: {}]
  %s5 = inlined_call_operand.hbm [shape: f32[1,16,64], index: 5, kind: output, shape index: {}]
  %s6 = sld [smem:[#allocation0]]
  $region34: #{tpu_custom_call.1} parent=0
    _
  %s8 = ssub.s32 1, %s6
  %s9 = scalar_select 0, %s8, %s6
  $region1: #{tpu_custom_call.1} parent=0
    #allocation2 [shape = 'u8[81920]{0}', space=vmem, size = 0x14000, scoped, tag = 'input window, operand 4, single buffered']
    #allocation3 [shape = 's32[1]{0}', space=sflag, size = 0x4, scoped, tag = 'scoped memory for tpu_custom_call.1']
    #allocation4 [shape = 's32[1]{0}', space=sflag, size = 0x4, scoped, tag = 'scoped memory for tpu_custom_call.1']
    #allocation5 [shape = 'u8[8192]{0}', space=vmem, size = 0x2000, scoped, tag = 'output window, operand 0, single buffered']
    %10 = vsyncpa [#allocation3], 0
    %11 = vsyncpa [#allocation4], 0
    // Predicated region
    $region2: #{tpu_custom_call.1} parent=1 // pred_check
      _
    $region3: #{tpu_custom_call.1} parent=1 // pred_check_branch
      %13 = sbr.rel (0) target = $region5
    $region4: #{tpu_custom_call.1} parent=1 // pred_region
      _
    $region5: #{tpu_custom_call.1} parent=1 // pred_fallthru
      _
    // Predicated region
    $region6: #{tpu_custom_call.1} parent=1 // pred_check
      _
    $region7: #{tpu_custom_call.1} parent=1 // pred_check_branch
      %15 = sbr.rel (0) target = $region9
    $region8: #{tpu_custom_call.1} parent=1 // pred_region
      _
    $region9: #{tpu_custom_call.1} parent=1 // pred_fallthru
      _
    // Predicated region
    $region10: #{tpu_custom_call.1} parent=1 // pred_check
      _
    $region11: #{tpu_custom_call.1} parent=1 // pred_check_branch
      %17 = sbr.rel (0) target = $region13
    $region12: #{tpu_custom_call.1} parent=1 // pred_region
      _
    $region13: #{tpu_custom_call.1} parent=1 // pred_fallthru
      _
    // Predicated region
    $region14: #{tpu_custom_call.1} parent=1 // pred_check
      _
    $region15: #{tpu_custom_call.1} parent=1 // pred_check_branch
      %19 = sbr.rel (0) target = $region17
    $region16: #{tpu_custom_call.1} parent=1 // pred_region
      _
    $region17: #{tpu_custom_call.1} parent=1 // pred_fallthru
      _
    // Predicated region
    $region18: #{tpu_custom_call.1} parent=1 // pred_check
      _
    $region19: #{tpu_custom_call.1} parent=1 // pred_check_branch
      %21 = sbr.rel (0) target = $region21
    $region20: #{tpu_custom_call.1} parent=1 // pred_region
      %s23 = ssub.s32 2560, 2560
      %24 = vsyncadd [#allocation3], %s23
      %s25 = sshll.u32 [#allocation2], 4
      %s26 = int_to_ptr.vmem [resolvable:$true] %s25
      %31 = dma.hbm_to_vmem [thread:$0]  %s4, 2560, %s26, [#allocation3], 256, 256, 16
    $region21: #{tpu_custom_call.1} parent=1 // pred_fallthru
      _
    // Predicated region
    $region22: #{tpu_custom_call.1} parent=1 // pred_check
      _
    $region23: #{tpu_custom_call.1} parent=1 // pred_check_branch
      %33 = sbr.rel (0) target = $region25
    $region24: #{tpu_custom_call.1} parent=1 // pred_region
      %34 = dma.done [#allocation3], 2560
    $region25: #{tpu_custom_call.1} parent=1 // pred_fallthru
      _
    %v35 = vld [vmem:[%s0] sm:$0xff]
    %v36 = vld [vmem:[%s0 + $0x8] sm:$0xff]
    %v37 = vld [vmem:[%s1] sm:$0xff]
    %v38 = vld [vmem:[%s1 + $0x8] sm:$0xff]
    %v39 = vld [vmem:[%s2] sm:$0xff]
    %v40 = vld [vmem:[%s2 + $0x8] sm:$0xff]
    %v41 = vld [vmem:[%s3] sm:$0xff]
    %v42 = vld [vmem:[%s3 + $0x8] sm:$0xff]
    %v43 = vld [vmem:[%s3 + $0x10] sm:$0x3]
    %v44 = vld [vmem:[%s3 + $0x18] sm:$0xff]
    %v45 = vld [vmem:[%s3 + $0x20] sm:$0xff]
    %v46 = vld [vmem:[%s3 + $0x28] sm:$0x3f]
    %v47 = vld [vmem:[%s3 + $0x30] sm:$0x3f]
    %v48 = vld [vmem:[%s3 + $0x38] sm:$0xff]
    %v49 = vld [vmem:[%s3 + $0x40] sm:$0xff]
    %v50 = vld [vmem:[%s3 + $0x48] sm:$0xff]
    %v51 = vld [vmem:[%s3 + $0x50] sm:$0xff]
    %v52 = vld [vmem:[#allocation2] sm:$0x3f]
    %v53 = vld [vmem:[#allocation2 + $0x8] sm:$0x3f]
    %v54 = vld [vmem:[#allocation2 + $0x10] sm:$0x3f]
    %v55 = vld [vmem:[#allocation2 + $0x18] sm:$0x3f]
    %v56 = vld [vmem:[#allocation2 + $0x20] sm:$0xff]
    %v57 = vld [vmem:[#allocation2 + $0x28] sm:$0xff]
    %v58 = vld [vmem:[#allocation2 + $0x30] sm:$0xff]
    %v59 = vld [vmem:[#allocation2 + $0x38] sm:$0xff]
    %v60 = vld [vmem:[#allocation2 + $0x40] sm:$0xff]
    %v61 = vld [vmem:[#allocation2 + $0x48] sm:$0xff]
    %v62 = vld [vmem:[#allocation2 + $0x50] sm:$0xff]
    %v63 = vld [vmem:[#allocation2 + $0x58] sm:$0xff]
    %v64 = vld [vmem:[#allocation2 + $0x60] sm:$0xff]
    %v65 = vld [vmem:[#allocation2 + $0x68] sm:$0xff]
    %v66 = vld [vmem:[#allocation2 + $0x70] sm:$0xff]
    %v67 = vld [vmem:[#allocation2 + $0x78] sm:$0xff]
    %v68 = vld [vmem:[#allocation2 + $0x80] sm:$0xff]
    %v69 = vld [vmem:[#allocation2 + $0x88] sm:$0xff]
    %v70 = vld [vmem:[#allocation2 + $0x90] sm:$0xff]
    %v71 = vld [vmem:[#allocation2 + $0x98] sm:$0xff]
    %vm72 = vcmask 130048
    %v74 = vsel %vm72, %v41, 0
    %v77 = vsel %vm72, %v42, 0
    %v80 = vsel %vm72, %v43, 0
    %82 = vmatprep.subr.mxu0 0.0
    %83 = vmatpush1.msra.mxu0 %v35
    %84 = vmatprep.subr.mxu0 0.0
    %85 = vmatpush1.msra.mxu0 %v36
    %86 = vmatprep.subr.mxu0 0.0
    %87 = vmatpush1.msra.mxu0 0.0
    %88 = vmatprep.subr.mxu0 0.0
    %89 = vmatpush1.msra.mxu0 0.0
    %90 = vmatprep.subr.mxu0 0.0
    %91 = vmatpush1.msra.mxu0 0.0
    %92 = vmatprep.subr.mxu0 0.0
    %93 = vmatpush1.msra.mxu0 0.0
    %94 = vmatprep.subr.mxu0 0.0
    %95 = vmatpush1.msra.mxu0 0.0
    %96 = vmatprep.subr.mxu0 0.0
    %97 = vmatpush1.msra.mxu0 0.0
    %98 = vmatprep.subr.mxu0 0.0
    %99 = vmatpush1.msra.mxu0 0.0
    %100 = vmatprep.subr.mxu0 0.0
    %101 = vmatpush1.msra.mxu0 0.0
    %102 = vmatprep.subr.mxu0 0.0
    %103 = vmatpush1.msra.mxu0 0.0
    %104 = vmatprep.subr.mxu0 0.0
    %105 = vmatpush1.msra.mxu0 0.0
    %106 = vmatprep.subr.mxu0 0.0
    %107 = vmatpush1.msra.mxu0 0.0
    %108 = vmatprep.subr.mxu0 0.0
    %109 = vmatpush1.msra.mxu0 0.0
    %110 = vmatprep.subr.mxu0 0.0
    %111 = vmatpush1.msra.mxu0 0.0
    %112 = vmatprep.subr.mxu0 0.0
    %113 = vmatpush1.msra.mxu0 0.0
    %114 = vmatprep.subr.mxu0 0.0
    %115 = vmatpush1.msra.mxu0 0.0
    %116 = vmatprep.subr.mxu0 0.0
    %117 = vmatpush1.msra.mxu0 0.0
    %118 = vmatprep.subr.mxu0 0.0
    %119 = vmatpush1.msra.mxu0 0.0
    %120 = vmatprep.subr.mxu0 0.0
    %121 = vmatpush1.msra.mxu0 0.0
    %122 = vmatprep.subr.mxu0 0.0
    %123 = vmatpush1.msra.mxu0 0.0
    %124 = vmatprep.subr.mxu0 0.0
    %125 = vmatpush1.msra.mxu0 0.0
    %126 = vmatprep.subr.mxu0 0.0
    %127 = vmatpush1.msra.mxu0 0.0
    %128 = vmatprep.subr.mxu0 0.0
    %129 = vmatpush1.msra.mxu0 0.0
    %130 = vmatprep.subr.mxu0 0.0
    %131 = vmatpush1.msra.mxu0 0.0
    %132 = vmatprep.subr.mxu0 0.0
    %133 = vmatpush1.msra.mxu0 0.0
    %134 = vmatprep.subr.mxu0 0.0
    %135 = vmatpush1.msra.mxu0 0.0
    %136 = vmatprep.subr.mxu0 0.0
    %137 = vmatpush1.msra.mxu0 0.0
    %138 = vmatprep.subr.mxu0 0.0
    %139 = vmatpush1.msra.mxu0 0.0
    %140 = vmatprep.subr.mxu0 0.0
    %141 = vmatpush1.msra.mxu0 0.0
    %142 = vmatprep.subr.mxu0 0.0
    %143 = vmatpush1.msra.mxu0 0.0
    %144 = vmatprep.subr.mxu0 0.0
    %145 = vmatpush1.msra.mxu0 0.0
    %146 = vmatprep.mubr.f32.mxu0 0.0
    %147 = vmatmul.mubr.f32.gmra.mrb[0].mxu0 %v74
    %v148 = vpop.f32.mrb[0].mxu0
    %v149 = vadd.f32 0.0, %v148
    %v150 = vpop.f32.mrb[0].mxu0
    %151 = vmatprep.mubr.f32.mxu0 0.0
    %152 = vmatmul.mubr.f32.gmra.mrb[0].mxu0 %v77
    %v153 = vpop.f32.mrb[0].mxu0
    %v154 = vadd.f32 0.0, %v153
    %v155 = vpop.f32.mrb[0].mxu0
    %156 = vmatprep.mubr.f32.mxu0 0.0
    %157 = vmatmul.mubr.f32.gmra.mrb[0].mxu0 %v80
    %v158 = vpop.f32.mrb[0].mxu0
    %v159 = vadd.f32 0.0, %v158
    %v160 = vpop.f32.mrb[0].mxu0
    %161 = vdwg.mxu0
    %v162 = vmul.f32 %v149, %v149
    %v163 = vmul.f32 %v154, %v154
    %v164 = vmul.f32 %v159, %v159
    %vm165 = vcmask 146432
    %v167 = vsel %vm165, %v44, 0
    %v170 = vsel %vm165, %v45, 0
    %vm172 = vcmask 1041408
    %v174 = vsel %vm172, %v164, 0
    %176 = vmatprep.subr.mxu0 0.0
    %177 = vmatpush1.msra.mxu0 %v162
    %178 = vmatprep.subr.mxu0 0.0
    %179 = vmatpush1.msra.mxu0 %v163
    %180 = vmatprep.subr.mxu0 0.0
    %181 = vmatpush1.msra.mxu0 %v174
    %182 = vmatprep.subr.mxu0 0.0
    %183 = vmatpush1.msra.mxu0 0.0
    %184 = vmatprep.subr.mxu0 0.0
    %185 = vmatpush1.msra.mxu0 0.0
    %186 = vmatprep.subr.mxu0 0.0
    %187 = vmatpush1.msra.mxu0 0.0
    %188 = vmatprep.subr.mxu0 0.0
    %189 = vmatpush1.msra.mxu0 0.0
    %190 = vmatprep.subr.mxu0 0.0
    %191 = vmatpush1.msra.mxu0 0.0
    %192 = vmatprep.subr.mxu0 0.0
    %193 = vmatpush1.msra.mxu0 0.0
    %194 = vmatprep.subr.mxu0 0.0
    %195 = vmatpush1.msra.mxu0 0.0
    %196 = vmatprep.subr.mxu0 0.0
    %197 = vmatpush1.msra.mxu0 0.0
    %198 = vmatprep.subr.mxu0 0.0
    %199 = vmatpush1.msra.mxu0 0.0
    %200 = vmatprep.subr.mxu0 0.0
    %201 = vmatpush1.msra.mxu0 0.0
    %202 = vmatprep.subr.mxu0 0.0
    %203 = vmatpush1.msra.mxu0 0.0
    %204 = vmatprep.subr.mxu0 0.0
    %205 = vmatpush1.msra.mxu0 0.0
    %206 = vmatprep.subr.mxu0 0.0
    %207 = vmatpush1.msra.mxu0 0.0
    %208 = vmatprep.subr.mxu0 0.0
    %209 = vmatpush1.msra.mxu0 0.0
    %210 = vmatprep.subr.mxu0 0.0
    %211 = vmatpush1.msra.mxu0 0.0
    %212 = vmatprep.subr.mxu0 0.0
    %213 = vmatpush1.msra.mxu0 0.0
    %214 = vmatprep.subr.mxu0 0.0
    %215 = vmatpush1.msra.mxu0 0.0
    %216 = vmatprep.subr.mxu0 0.0
    %217 = vmatpush1.msra.mxu0 0.0
    %218 = vmatprep.subr.mxu0 0.0
    %219 = vmatpush1.msra.mxu0 0.0
    %220 = vmatprep.subr.mxu0 0.0
    %221 = vmatpush1.msra.mxu0 0.0
    %222 = vmatprep.subr.mxu0 0.0
    %223 = vmatpush1.msra.mxu0 0.0
    %224 = vmatprep.subr.mxu0 0.0
    %225 = vmatpush1.msra.mxu0 0.0
    %226 = vmatprep.subr.mxu0 0.0
    %227 = vmatpush1.msra.mxu0 0.0
    %228 = vmatprep.subr.mxu0 0.0
    %229 = vmatpush1.msra.mxu0 0.0
    %230 = vmatprep.subr.mxu0 0.0
    %231 = vmatpush1.msra.mxu0 0.0
    %232 = vmatprep.subr.mxu0 0.0
    %233 = vmatpush1.msra.mxu0 0.0
    %234 = vmatprep.subr.mxu0 0.0
    %235 = vmatpush1.msra.mxu0 0.0
    %236 = vmatprep.subr.mxu0 0.0
    %237 = vmatpush1.msra.mxu0 0.0
    %238 = vmatprep.subr.mxu0 0.0
    %239 = vmatpush1.msra.mxu0 0.0
    %240 = vmatprep.mubr.f32.mxu0 0.0
    %241 = vmatmul.mubr.f32.gmra.mrb[0].mxu0 %v167
    %v242 = vpop.f32.mrb[0].mxu0
    %v243 = vadd.f32 0.0, %v242
    %v244 = vpop.f32.mrb[0].mxu0
    %245 = vmatprep.mubr.f32.mxu0 0.0
    %246 = vmatmul.mubr.f32.gmra.mrb[0].mxu0 %v170
    %v247 = vpop.f32.mrb[0].mxu0
    %v248 = vadd.f32 0.0, %v247
    %v249 = vpop.f32.mrb[0].mxu0
    %250 = vdwg.mxu0
    %v251 = vrcp.pop %v243
    %v252 = vlaneseq
    %v253 = vshrl.u32 %v252, 7
    %v254 = vsub.s32 0, %v253
    %v255 = vrot.slane %v251, %v254
    %v256 = vmul.f32 %v243, %v255
    %v257 = vmul.f32 %v248, %v255
    %v259 = vsel %vm72, %v46, 0
    %261 = vmatprep.subr.mxu0 0.0
    %262 = vmatpush1.msra.mxu0 %v35
    %263 = vmatprep.subr.mxu0 0.0
    %264 = vmatpush1.msra.mxu0 %v36
    %265 = vmatprep.subr.mxu0 0.0
    %266 = vmatpush1.msra.mxu0 0.0
    %267 = vmatprep.subr.mxu0 0.0
    %268 = vmatpush1.msra.mxu0 0.0
    %269 = vmatprep.subr.mxu0 0.0
    %270 = vmatpush1.msra.mxu0 0.0
    %271 = vmatprep.subr.mxu0 0.0
    %272 = vmatpush1.msra.mxu0 0.0
    %273 = vmatprep.subr.mxu0 0.0
    %274 = vmatpush1.msra.mxu0 0.0
    %275 = vmatprep.subr.mxu0 0.0
    %276 = vmatpush1.msra.mxu0 0.0
    %277 = vmatprep.subr.mxu0 0.0
    %278 = vmatpush1.msra.mxu0 0.0
    %279 = vmatprep.subr.mxu0 0.0
    %280 = vmatpush1.msra.mxu0 0.0
    %281 = vmatprep.subr.mxu0 0.0
    %282 = vmatpush1.msra.mxu0 0.0
    %283 = vmatprep.subr.mxu0 0.0
    %284 = vmatpush1.msra.mxu0 0.0
    %285 = vmatprep.subr.mxu0 0.0
    %286 = vmatpush1.msra.mxu0 0.0
    %287 = vmatprep.subr.mxu0 0.0
    %288 = vmatpush1.msra.mxu0 0.0
    %289 = vmatprep.subr.mxu0 0.0
    %290 = vmatpush1.msra.mxu0 0.0
    %291 = vmatprep.subr.mxu0 0.0
    %292 = vmatpush1.msra.mxu0 0.0
    %293 = vmatprep.subr.mxu0 0.0
    %294 = vmatpush1.msra.mxu0 0.0
    %295 = vmatprep.subr.mxu0 0.0
    %296 = vmatpush1.msra.mxu0 0.0
    %297 = vmatprep.subr.mxu0 0.0
    %298 = vmatpush1.msra.mxu0 0.0
    %299 = vmatprep.subr.mxu0 0.0
    %300 = vmatpush1.msra.mxu0 0.0
    %301 = vmatprep.subr.mxu0 0.0
    %302 = vmatpush1.msra.mxu0 0.0
    %303 = vmatprep.subr.mxu0 0.0
    %304 = vmatpush1.msra.mxu0 0.0
    %305 = vmatprep.subr.mxu0 0.0
    %306 = vmatpush1.msra.mxu0 0.0
    %307 = vmatprep.subr.mxu0 0.0
    %308 = vmatpush1.msra.mxu0 0.0
    %309 = vmatprep.subr.mxu0 0.0
    %310 = vmatpush1.msra.mxu0 0.0
    %311 = vmatprep.subr.mxu0 0.0
    %312 = vmatpush1.msra.mxu0 0.0
    %313 = vmatprep.subr.mxu0 0.0
    %314 = vmatpush1.msra.mxu0 0.0
    %315 = vmatprep.subr.mxu0 0.0
    %316 = vmatpush1.msra.mxu0 0.0
    %317 = vmatprep.subr.mxu0 0.0
    %318 = vmatpush1.msra.mxu0 0.0
    %319 = vmatprep.subr.mxu0 0.0
    %320 = vmatpush1.msra.mxu0 0.0
    %321 = vmatprep.subr.mxu0 0.0
    %322 = vmatpush1.msra.mxu0 0.0
    %323 = vmatprep.subr.mxu0 0.0
    %324 = vmatpush1.msra.mxu0 0.0
    %325 = vmatprep.mubr.f32.mxu0 0.0
    %326 = vmatmul.mubr.f32.gmra.mrb[0].mxu0 %v259
    %v327 = vpop.f32.mrb[0].mxu0
    %v328 = vadd.f32 0.0, %v327
    %v329 = vpop.f32.mrb[0].mxu0
    %330 = vdwg.mxu0
    %v332 = vsel %vm72, %v47, 0
    %334 = vmatprep.subr.mxu0 0.0
    %335 = vmatpush1.msra.mxu0 %v35
    %336 = vmatprep.subr.mxu0 0.0
    %337 = vmatpush1.msra.mxu0 %v36
    %338 = vmatprep.subr.mxu0 0.0
    %339 = vmatpush1.msra.mxu0 0.0
    %340 = vmatprep.subr.mxu0 0.0
    %341 = vmatpush1.msra.mxu0 0.0
    %342 = vmatprep.subr.mxu0 0.0
    %343 = vmatpush1.msra.mxu0 0.0
    %344 = vmatprep.subr.mxu0 0.0
    %345 = vmatpush1.msra.mxu0 0.0
    %346 = vmatprep.subr.mxu0 0.0
    %347 = vmatpush1.msra.mxu0 0.0
    %348 = vmatprep.subr.mxu0 0.0
    %349 = vmatpush1.msra.mxu0 0.0
    %350 = vmatprep.subr.mxu0 0.0
    %351 = vmatpush1.msra.mxu0 0.0
    %352 = vmatprep.subr.mxu0 0.0
    %353 = vmatpush1.msra.mxu0 0.0
    %354 = vmatprep.subr.mxu0 0.0
    %355 = vmatpush1.msra.mxu0 0.0
    %356 = vmatprep.subr.mxu0 0.0
    %357 = vmatpush1.msra.mxu0 0.0
    %358 = vmatprep.subr.mxu0 0.0
    %359 = vmatpush1.msra.mxu0 0.0
    %360 = vmatprep.subr.mxu0 0.0
    %361 = vmatpush1.msra.mxu0 0.0
    %362 = vmatprep.subr.mxu0 0.0
    %363 = vmatpush1.msra.mxu0 0.0
    %364 = vmatprep.subr.mxu0 0.0
    %365 = vmatpush1.msra.mxu0 0.0
    %366 = vmatprep.subr.mxu0 0.0
    %367 = vmatpush1.msra.mxu0 0.0
    %368 = vmatprep.subr.mxu0 0.0
    %369 = vmatpush1.msra.mxu0 0.0
    %370 = vmatprep.subr.mxu0 0.0
    %371 = vmatpush1.msra.mxu0 0.0
    %372 = vmatprep.subr.mxu0 0.0
    %373 = vmatpush1.msra.mxu0 0.0
    %374 = vmatprep.subr.mxu0 0.0
    %375 = vmatpush1.msra.mxu0 0.0
    %376 = vmatprep.subr.mxu0 0.0
    %377 = vmatpush1.msra.mxu0 0.0
    %378 = vmatprep.subr.mxu0 0.0
    %379 = vmatpush1.msra.mxu0 0.0
    %380 = vmatprep.subr.mxu0 0.0
    %381 = vmatpush1.msra.mxu0 0.0
    %382 = vmatprep.subr.mxu0 0.0
    %383 = vmatpush1.msra.mxu0 0.0
    %384 = vmatprep.subr.mxu0 0.0
    %385 = vmatpush1.msra.mxu0 0.0
    %386 = vmatprep.subr.mxu0 0.0
    %387 = vmatpush1.msra.mxu0 0.0
    %388 = vmatprep.subr.mxu0 0.0
    %389 = vmatpush1.msra.mxu0 0.0
    %390 = vmatprep.subr.mxu0 0.0
    %391 = vmatpush1.msra.mxu0 0.0
    %392 = vmatprep.subr.mxu0 0.0
    %393 = vmatpush1.msra.mxu0 0.0
    %394 = vmatprep.subr.mxu0 0.0
    %395 = vmatpush1.msra.mxu0 0.0
    %396 = vmatprep.subr.mxu0 0.0
    %397 = vmatpush1.msra.mxu0 0.0
    %398 = vmatprep.mubr.f32.mxu0 0.0
    %399 = vmatmul.mubr.f32.gmra.mrb[0].mxu0 %v332
    %v400 = vpop.f32.mrb[0].mxu0
    %v401 = vadd.f32 0.0, %v400
    %v402 = vpop.f32.mrb[0].mxu0
    %403 = vdwg.mxu0
    %405 = vrot.lane.b32.xlu0 %v328, 64
    %v406 = vpop.permute.xlu0 %405
    %vm408 = vcmask 523264
    %v409 = vsel %vm408, %v328, %v406
    %411 = vrot.lane.b32.xlu0 %v401, 64
    %v412 = vpop.permute.xlu0 %411
    %v414 = vsel %vm408, %v401, %v412
    %v415 = vmul.f32 %v409, %v52
    %v416 = vmul.f32 %v409, %v53
    %v417 = vmul.f32 %v414, %v54
    %v418 = vmul.f32 %v414, %v55
    %v419 = vsub.f32 %v415, %v417
    %v420 = vsub.f32 %v416, %v418
    %v421 = vmul.f32 %v409, %v54
    %v422 = vmul.f32 %v409, %v55
    %v423 = vmul.f32 %v414, %v52
    %v424 = vmul.f32 %v414, %v53
    %v425 = vadd.f32 %v421, %v423
    %v426 = vadd.f32 %v422, %v424
    %v429 = vrot.slane %v425, 2
    %v430 = vrot.slane %v426, 2
    %vm433 = vcmask 1045504
    %v434 = vsel %vm433, %v419, %v429
    %v435 = vsel %vm433, %v420, %v430
    %436 = vmatprep.subr.mxu0 %v57
    %437 = vmatpush1.xpose.msra.mxu0 %v56
    %438 = vmatprep.subr.mxu0 %v59
    %439 = vmatpush1.xpose.msra.mxu0 %v58
    %440 = vmatprep.subr.mxu0 %v61
    %441 = vmatpush1.xpose.msra.mxu0 %v60
    %442 = vmatprep.subr.mxu0 %v63
    %443 = vmatpush1.xpose.msra.mxu0 %v62
    %444 = vmatprep.subr.mxu0 %v65
    %445 = vmatpush1.xpose.msra.mxu0 %v64
    %446 = vmatprep.subr.mxu0 %v67
    %447 = vmatpush1.xpose.msra.mxu0 %v66
    %448 = vmatprep.subr.mxu0 %v69
    %449 = vmatpush1.xpose.msra.mxu0 %v68
    %450 = vmatprep.subr.mxu0 %v71
    %451 = vmatpush1.xpose.msra.mxu0 %v70
    %452 = vmatprep.subr.mxu0 0.0
    %453 = vmatpush1.xpose.msra.mxu0 0.0
    %454 = vmatprep.subr.mxu0 0.0
    %455 = vmatpush1.xpose.msra.mxu0 0.0
    %456 = vmatprep.subr.mxu0 0.0
    %457 = vmatpush1.xpose.msra.mxu0 0.0
    %458 = vmatprep.subr.mxu0 0.0
    %459 = vmatpush1.xpose.msra.mxu0 0.0
    %460 = vmatprep.subr.mxu0 0.0
    %461 = vmatpush1.xpose.msra.mxu0 0.0
    %462 = vmatprep.subr.mxu0 0.0
    %463 = vmatpush1.xpose.msra.mxu0 0.0
    %464 = vmatprep.subr.mxu0 0.0
    %465 = vmatpush1.xpose.msra.mxu0 0.0
    %466 = vmatprep.subr.mxu0 0.0
    %467 = vmatpush1.xpose.msra.mxu0 0.0
    %468 = vmatprep.subr.mxu0 0.0
    %469 = vmatpush1.xpose.msra.mxu0 0.0
    %470 = vmatprep.subr.mxu0 0.0
    %471 = vmatpush1.xpose.msra.mxu0 0.0
    %472 = vmatprep.subr.mxu0 0.0
    %473 = vmatpush1.xpose.msra.mxu0 0.0
    %474 = vmatprep.subr.mxu0 0.0
    %475 = vmatpush1.xpose.msra.mxu0 0.0
    %476 = vmatprep.subr.mxu0 0.0
    %477 = vmatpush1.xpose.msra.mxu0 0.0
    %478 = vmatprep.subr.mxu0 0.0
    %479 = vmatpush1.xpose.msra.mxu0 0.0
    %480 = vmatprep.subr.mxu0 0.0
    %481 = vmatpush1.xpose.msra.mxu0 0.0
    %482 = vmatprep.subr.mxu0 0.0
    %483 = vmatpush1.xpose.msra.mxu0 0.0
    %484 = vmatprep.subr.mxu0 0.0
    %485 = vmatpush1.xpose.msra.mxu0 0.0
    %486 = vmatprep.subr.mxu0 0.0
    %487 = vmatpush1.xpose.msra.mxu0 0.0
    %488 = vmatprep.subr.mxu0 0.0
    %489 = vmatpush1.xpose.msra.mxu0 0.0
    %490 = vmatprep.subr.mxu0 0.0
    %491 = vmatpush1.xpose.msra.mxu0 0.0
    %492 = vmatprep.subr.mxu0 0.0
    %493 = vmatpush1.xpose.msra.mxu0 0.0
    %494 = vmatprep.subr.mxu0 0.0
    %495 = vmatpush1.xpose.msra.mxu0 0.0
    %496 = vmatprep.subr.mxu0 0.0
    %497 = vmatpush1.xpose.msra.mxu0 0.0
    %498 = vmatprep.subr.mxu0 0.0
    %499 = vmatpush1.xpose.msra.mxu0 0.0
    %500 = vmatprep.mubr.f32.mxu0 %v435
    %501 = vmatmul.mubr.f32.gmra.mrb[0].mxu0 %v434
    %v502 = vpop.f32.mrb[0].mxu0
    %v503 = vadd.f32 0.0, %v502
    %v504 = vpop.f32.mrb[0].mxu0
    %505 = vmatprep.mubr.f32.mxu0 %v430
    %506 = vmatmul.mubr.f32.gmra.mrb[0].mxu0 %v429
    %v507 = vpop.f32.mrb[0].mxu0
    %v508 = vadd.f32 0.0, %v507
    %v509 = vpop.f32.mrb[0].mxu0
    %510 = vdwg.mxu0
    %vm511 = vcmask 97280
    %v513 = vsel %vm511, %v48, 0
    %v516 = vsel %vm511, %v49, 0
    %vm518 = vcmask 1043456
    %v520 = vsel %vm518, %v508, 0
    %522 = vmatprep.subr.mxu0 0.0
    %523 = vmatpush1.msra.mxu0 %v503
    %524 = vmatprep.subr.mxu0 0.0
    %525 = vmatpush1.msra.mxu0 %v520
    %526 = vmatprep.subr.mxu0 0.0
    %527 = vmatpush1.msra.mxu0 0.0
    %528 = vmatprep.subr.mxu0 0.0
    %529 = vmatpush1.msra.mxu0 0.0
    %530 = vmatprep.subr.mxu0 0.0
    %531 = vmatpush1.msra.mxu0 0.0
    %532 = vmatprep.subr.mxu0 0.0
    %533 = vmatpush1.msra.mxu0 0.0
    %534 = vmatprep.subr.mxu0 0.0
    %535 = vmatpush1.msra.mxu0 0.0
    %536 = vmatprep.subr.mxu0 0.0
    %537 = vmatpush1.msra.mxu0 0.0
    %538 = vmatprep.subr.mxu0 0.0
    %539 = vmatpush1.msra.mxu0 0.0
    %540 = vmatprep.subr.mxu0 0.0
    %541 = vmatpush1.msra.mxu0 0.0
    %542 = vmatprep.subr.mxu0 0.0
    %543 = vmatpush1.msra.mxu0 0.0
    %544 = vmatprep.subr.mxu0 0.0
    %545 = vmatpush1.msra.mxu0 0.0
    %546 = vmatprep.subr.mxu0 0.0
    %547 = vmatpush1.msra.mxu0 0.0
    %548 = vmatprep.subr.mxu0 0.0
    %549 = vmatpush1.msra.mxu0 0.0
    %550 = vmatprep.subr.mxu0 0.0
    %551 = vmatpush1.msra.mxu0 0.0
    %552 = vmatprep.subr.mxu0 0.0
    %553 = vmatpush1.msra.mxu0 0.0
    %554 = vmatprep.subr.mxu0 0.0
    %555 = vmatpush1.msra.mxu0 0.0
    %556 = vmatprep.subr.mxu0 0.0
    %557 = vmatpush1.msra.mxu0 0.0
    %558 = vmatprep.subr.mxu0 0.0
    %559 = vmatpush1.msra.mxu0 0.0
    %560 = vmatprep.subr.mxu0 0.0
    %561 = vmatpush1.msra.mxu0 0.0
    %562 = vmatprep.subr.mxu0 0.0
    %563 = vmatpush1.msra.mxu0 0.0
    %564 = vmatprep.subr.mxu0 0.0
    %565 = vmatpush1.msra.mxu0 0.0
    %566 = vmatprep.subr.mxu0 0.0
    %567 = vmatpush1.msra.mxu0 0.0
    %568 = vmatprep.subr.mxu0 0.0
    %569 = vmatpush1.msra.mxu0 0.0
    %570 = vmatprep.subr.mxu0 0.0
    %571 = vmatpush1.msra.mxu0 0.0
    %572 = vmatprep.subr.mxu0 0.0
    %573 = vmatpush1.msra.mxu0 0.0
    %574 = vmatprep.subr.mxu0 0.0
    %575 = vmatpush1.msra.mxu0 0.0
    %576 = vmatprep.subr.mxu0 0.0
    %577 = vmatpush1.msra.mxu0 0.0
    %578 = vmatprep.subr.mxu0 0.0
    %579 = vmatpush1.msra.mxu0 0.0
    %580 = vmatprep.subr.mxu0 0.0
    %581 = vmatpush1.msra.mxu0 0.0
    %582 = vmatprep.subr.mxu0 0.0
    %583 = vmatpush1.msra.mxu0 0.0
    %584 = vmatprep.subr.mxu0 0.0
    %585 = vmatpush1.msra.mxu0 0.0
    %586 = vmatprep.mubr.f32.mxu0 0.0
    %587 = vmatmul.mubr.f32.gmra.mrb[0].mxu0 %v513
    %v588 = vpop.f32.mrb[0].mxu0
    %v589 = vadd.f32 0.0, %v588
    %v590 = vpop.f32.mrb[0].mxu0
    %591 = vmatprep.mubr.f32.mxu0 0.0
    %592 = vmatmul.mubr.f32.gmra.mrb[0].mxu0 %v516
    %v593 = vpop.f32.mrb[0].mxu0
    %v594 = vadd.f32 0.0, %v593
    %v595 = vpop.f32.mrb[0].mxu0
    %596 = vdwg.mxu0
    %v597 = vlaneseq
    %v598 = vshrl.u32 %v597, 7
    %v599 = vadd.s32 %v598, 8
    %v600 = vadd.s32 %v598, 16
    %v601 = vadd.s32 %v598, 24
    %v602 = vadd.s32 %v598, 32
    %v603 = vadd.s32 %v598, 40
    %v604 = vadd.s32 %v598, 48
    %v605 = vadd.s32 %v598, 56
    %v606 = vadd.s32 %v598, 64
    %v607 = vadd.s32 %v598, 72
    %v608 = vadd.s32 %v598, 80
    %v609 = vadd.s32 %v598, 88
    %v610 = vadd.s32 %v598, 96
    %v611 = vadd.s32 %v598, 104
    %v612 = vadd.s32 %v598, 112
    %v613 = vadd.s32 %v598, 120
    %v614 = vadd.s32 %v598, 128
    %v615 = vadd.s32 %v598, 136
    %v616 = vadd.s32 %v598, 144
    %v617 = vadd.s32 %v598, 152
    %v618 = vadd.s32 %v598, 160
    %v619 = vadd.s32 %v598, 168
    %v620 = vadd.s32 %v598, 176
    %v621 = vadd.s32 %v598, 184
    %v622 = vadd.s32 %v598, 192
    %v623 = vadd.s32 %v598, 200
    %v624 = vadd.s32 %v598, 208
    %v625 = vadd.s32 %v598, 216
    %v626 = vadd.s32 %v598, 224
    %v627 = vadd.s32 %v598, 232
    %v628 = vadd.s32 %v598, 240
    %v629 = vadd.s32 %v598, 248
    %v630 = vcvt.s32.f32 %v598
    %v631 = vcvt.s32.f32 %v599
    %v632 = vcvt.s32.f32 %v600
    %v633 = vcvt.s32.f32 %v601
    %v634 = vcvt.s32.f32 %v602
    %v635 = vcvt.s32.f32 %v603
    %v636 = vcvt.s32.f32 %v604
    %v637 = vcvt.s32.f32 %v605
    %v638 = vcvt.s32.f32 %v606
    %v639 = vcvt.s32.f32 %v607
    %v640 = vcvt.s32.f32 %v608
    %v641 = vcvt.s32.f32 %v609
    %v642 = vcvt.s32.f32 %v610
    %v643 = vcvt.s32.f32 %v611
    %v644 = vcvt.s32.f32 %v612
    %v645 = vcvt.s32.f32 %v613
    %v646 = vcvt.s32.f32 %v614
    %v647 = vcvt.s32.f32 %v615
    %v648 = vcvt.s32.f32 %v616
    %v649 = vcvt.s32.f32 %v617
    %v650 = vcvt.s32.f32 %v618
    %v651 = vcvt.s32.f32 %v619
    %v652 = vcvt.s32.f32 %v620
    %v653 = vcvt.s32.f32 %v621
    %v654 = vcvt.s32.f32 %v622
    %v655 = vcvt.s32.f32 %v623
    %v656 = vcvt.s32.f32 %v624
    %v657 = vcvt.s32.f32 %v625
    %v658 = vcvt.s32.f32 %v626
    %v659 = vcvt.s32.f32 %v627
    %v660 = vcvt.s32.f32 %v628
    %v661 = vcvt.s32.f32 %v629
    %v662 = vlaneseq
    %v663 = vand.u32 %v662, 127
    %v664 = vcvt.s32.f32 %v663
    %v665 = vadd.f32 %v630, 0.5
    %v666 = vadd.f32 %v631, 0.5
    %v667 = vadd.f32 %v632, 0.5
    %v668 = vadd.f32 %v633, 0.5
    %v669 = vadd.f32 %v634, 0.5
    %v670 = vadd.f32 %v635, 0.5
    %v671 = vadd.f32 %v636, 0.5
    %v672 = vadd.f32 %v637, 0.5
    %v673 = vadd.f32 %v638, 0.5
    %v674 = vadd.f32 %v639, 0.5
    %v675 = vadd.f32 %v640, 0.5
    %v676 = vadd.f32 %v641, 0.5
    %v677 = vadd.f32 %v642, 0.5
    %v678 = vadd.f32 %v643, 0.5
    %v679 = vadd.f32 %v644, 0.5
    %v680 = vadd.f32 %v645, 0.5
    %v681 = vadd.f32 %v646, 0.5
    %v682 = vadd.f32 %v647, 0.5
    %v683 = vadd.f32 %v648, 0.5
    %v684 = vadd.f32 %v649, 0.5
    %v685 = vadd.f32 %v650, 0.5
    %v686 = vadd.f32 %v651, 0.5
    %v687 = vadd.f32 %v652, 0.5
    %v688 = vadd.f32 %v653, 0.5
    %v689 = vadd.f32 %v654, 0.5
    %v690 = vadd.f32 %v655, 0.5
    %v691 = vadd.f32 %v656, 0.5
    %v692 = vadd.f32 %v657, 0.5
    %v693 = vadd.f32 %v658, 0.5
    %v694 = vadd.f32 %v659, 0.5
    %v695 = vadd.f32 %v660, 0.5
    %v696 = vadd.f32 %v661, 0.5
    %v697 = vmul.f32 %v665, 0.0625
    %v698 = vmul.f32 %v666, 0.0625
    %v699 = vmul.f32 %v667, 0.0625
    %v700 = vmul.f32 %v668, 0.0625
    %v701 = vmul.f32 %v669, 0.0625
    %v702 = vmul.f32 %v670, 0.0625
    %v703 = vmul.f32 %v671, 0.0625
    %v704 = vmul.f32 %v672, 0.0625
    %v705 = vmul.f32 %v673, 0.0625
    %v706 = vmul.f32 %v674, 0.0625
    %v707 = vmul.f32 %v675, 0.0625
    %v708 = vmul.f32 %v676, 0.0625
    %v709 = vmul.f32 %v677, 0.0625
    %v710 = vmul.f32 %v678, 0.0625
    %v711 = vmul.f32 %v679, 0.0625
    %v712 = vmul.f32 %v680, 0.0625
    %v713 = vmul.f32 %v681, 0.0625
    %v714 = vmul.f32 %v682, 0.0625
    %v715 = vmul.f32 %v683, 0.0625
    %v716 = vmul.f32 %v684, 0.0625
    %v717 = vmul.f32 %v685, 0.0625
    %v718 = vmul.f32 %v686, 0.0625
    %v719 = vmul.f32 %v687, 0.0625
    %v720 = vmul.f32 %v688, 0.0625
    %v721 = vmul.f32 %v689, 0.0625
    %v722 = vmul.f32 %v690, 0.0625
    %v723 = vmul.f32 %v691, 0.0625
    %v724 = vmul.f32 %v692, 0.0625
    %v725 = vmul.f32 %v693, 0.0625
    %v726 = vmul.f32 %v694, 0.0625
    %v727 = vmul.f32 %v695, 0.0625
    %v728 = vmul.f32 %v696, 0.0625
    %v729 = vfloor.f32 %v697
    %v730 = vfloor.f32 %v698
    %v731 = vfloor.f32 %v699
    %v732 = vfloor.f32 %v700
    %v733 = vfloor.f32 %v701
    %v734 = vfloor.f32 %v702
    %v735 = vfloor.f32 %v703
    %v736 = vfloor.f32 %v704
    %v737 = vfloor.f32 %v705
    %v738 = vfloor.f32 %v706
    %v739 = vfloor.f32 %v707
    %v740 = vfloor.f32 %v708
    %v741 = vfloor.f32 %v709
    %v742 = vfloor.f32 %v710
    %v743 = vfloor.f32 %v711
    %v744 = vfloor.f32 %v712
    %v745 = vfloor.f32 %v713
    %v746 = vfloor.f32 %v714
    %v747 = vfloor.f32 %v715
    %v748 = vfloor.f32 %v716
    %v749 = vfloor.f32 %v717
    %v750 = vfloor.f32 %v718
    %v751 = vfloor.f32 %v719
    %v752 = vfloor.f32 %v720
    %v753 = vfloor.f32 %v721
    %v754 = vfloor.f32 %v722
    %v755 = vfloor.f32 %v723
    %v756 = vfloor.f32 %v724
    %v757 = vfloor.f32 %v725
    %v758 = vfloor.f32 %v726
    %v759 = vfloor.f32 %v727
    %v760 = vfloor.f32 %v728
    %v761 = vadd.f32 %v664, 0.5
    %v762 = vmul.f32 %v761, 0.25
    %v763 = vfloor.f32 %v762
    %vm764 = vcmp.eq.f32.partialorder %v729, %v763
    %vm765 = vcmp.eq.f32.partialorder %v730, %v763
    %vm766 = vcmp.eq.f32.partialorder %v731, %v763
    %vm767 = vcmp.eq.f32.partialorder %v732, %v763
    %vm768 = vcmp.eq.f32.partialorder %v733, %v763
    %vm769 = vcmp.eq.f32.partialorder %v734, %v763
    %vm770 = vcmp.eq.f32.partialorder %v735, %v763
    %vm771 = vcmp.eq.f32.partialorder %v736, %v763
    %vm772 = vcmp.eq.f32.partialorder %v737, %v763
    %vm773 = vcmp.eq.f32.partialorder %v738, %v763
    %vm774 = vcmp.eq.f32.partialorder %v739, %v763
    %vm775 = vcmp.eq.f32.partialorder %v740, %v763
    %vm776 = vcmp.eq.f32.partialorder %v741, %v763
    %vm777 = vcmp.eq.f32.partialorder %v742, %v763
    %vm778 = vcmp.eq.f32.partialorder %v743, %v763
    %vm779 = vcmp.eq.f32.partialorder %v744, %v763
    %vm780 = vcmp.eq.f32.partialorder %v745, %v763
    %vm781 = vcmp.eq.f32.partialorder %v746, %v763
    %vm782 = vcmp.eq.f32.partialorder %v747, %v763
    %vm783 = vcmp.eq.f32.partialorder %v748, %v763
    %vm784 = vcmp.eq.f32.partialorder %v749, %v763
    %vm785 = vcmp.eq.f32.partialorder %v750, %v763
    %vm786 = vcmp.eq.f32.partialorder %v751, %v763
    %vm787 = vcmp.eq.f32.partialorder %v752, %v763
    %vm788 = vcmp.eq.f32.partialorder %v753, %v763
    %vm789 = vcmp.eq.f32.partialorder %v754, %v763
    %vm790 = vcmp.eq.f32.partialorder %v755, %v763
    %vm791 = vcmp.eq.f32.partialorder %v756, %v763
    %vm792 = vcmp.eq.f32.partialorder %v757, %v763
    %vm793 = vcmp.eq.f32.partialorder %v758, %v763
    %vm794 = vcmp.eq.f32.partialorder %v759, %v763
    %vm795 = vcmp.eq.f32.partialorder %v760, %v763
    %v796 = vsel %vm764, 1, 0
    %v797 = vsel %vm765, 1, 0
    %v798 = vsel %vm766, 1, 0
    %v799 = vsel %vm767, 1, 0
    %v800 = vsel %vm768, 1, 0
    %v801 = vsel %vm769, 1, 0
    %v802 = vsel %vm770, 1, 0
    %v803 = vsel %vm771, 1, 0
    %v804 = vsel %vm772, 1, 0
    %v805 = vsel %vm773, 1, 0
    %v806 = vsel %vm774, 1, 0
    %v807 = vsel %vm775, 1, 0
    %v808 = vsel %vm776, 1, 0
    %v809 = vsel %vm777, 1, 0
    %v810 = vsel %vm778, 1, 0
    %v811 = vsel %vm779, 1, 0
    %v812 = vsel %vm780, 1, 0
    %v813 = vsel %vm781, 1, 0
    %v814 = vsel %vm782, 1, 0
    %v815 = vsel %vm783, 1, 0
    %v816 = vsel %vm784, 1, 0
    %v817 = vsel %vm785, 1, 0
    %v818 = vsel %vm786, 1, 0
    %v819 = vsel %vm787, 1, 0
    %v820 = vsel %vm788, 1, 0
    %v821 = vsel %vm789, 1, 0
    %v822 = vsel %vm790, 1, 0
    %v823 = vsel %vm791, 1, 0
    %v824 = vsel %vm792, 1, 0
    %v825 = vsel %vm793, 1, 0
    %v826 = vsel %vm794, 1, 0
    %v827 = vsel %vm795, 1, 0
    %v828 = vcvt.s32.f32 %v796
    %v829 = vcvt.s32.f32 %v797
    %v830 = vcvt.s32.f32 %v798
    %v831 = vcvt.s32.f32 %v799
    %v832 = vcvt.s32.f32 %v800
    %v833 = vcvt.s32.f32 %v801
    %v834 = vcvt.s32.f32 %v802
    %v835 = vcvt.s32.f32 %v803
    %v836 = vcvt.s32.f32 %v804
    %v837 = vcvt.s32.f32 %v805
    %v838 = vcvt.s32.f32 %v806
    %v839 = vcvt.s32.f32 %v807
    %v840 = vcvt.s32.f32 %v808
    %v841 = vcvt.s32.f32 %v809
    %v842 = vcvt.s32.f32 %v810
    %v843 = vcvt.s32.f32 %v811
    %v844 = vcvt.s32.f32 %v812
    %v845 = vcvt.s32.f32 %v813
    %v846 = vcvt.s32.f32 %v814
    %v847 = vcvt.s32.f32 %v815
    %v848 = vcvt.s32.f32 %v816
    %v849 = vcvt.s32.f32 %v817
    %v850 = vcvt.s32.f32 %v818
    %v851 = vcvt.s32.f32 %v819
    %v852 = vcvt.s32.f32 %v820
    %v853 = vcvt.s32.f32 %v821
    %v854 = vcvt.s32.f32 %v822
    %v855 = vcvt.s32.f32 %v823
    %v856 = vcvt.s32.f32 %v824
    %v857 = vcvt.s32.f32 %v825
    %v858 = vcvt.s32.f32 %v826
    %v859 = vcvt.s32.f32 %v827
    %v860 = vmul.f32 %v256, %v828
    %v861 = vmul.f32 %v257, %v829
    %v862 = vmul.f32 %v256, %v830
    %v863 = vmul.f32 %v257, %v831
    %v864 = vmul.f32 %v256, %v832
    %v865 = vmul.f32 %v257, %v833
    %v866 = vmul.f32 %v256, %v834
    %v867 = vmul.f32 %v257, %v835
    %v868 = vmul.f32 %v256, %v836
    %v869 = vmul.f32 %v257, %v837
    %v870 = vmul.f32 %v256, %v838
    %v871 = vmul.f32 %v257, %v839
    %v872 = vmul.f32 %v256, %v840
    %v873 = vmul.f32 %v257, %v841
    %v874 = vmul.f32 %v256, %v842
    %v875 = vmul.f32 %v257, %v843
    %v876 = vmul.f32 %v256, %v844
    %v877 = vmul.f32 %v257, %v845
    %v878 = vmul.f32 %v256, %v846
    %v879 = vmul.f32 %v257, %v847
    %v880 = vmul.f32 %v256, %v848
    %v881 = vmul.f32 %v257, %v849
    %v882 = vmul.f32 %v256, %v850
    %v883 = vmul.f32 %v257, %v851
    %v884 = vmul.f32 %v256, %v852
    %v885 = vmul.f32 %v257, %v853
    %v886 = vmul.f32 %v256, %v854
    %v887 = vmul.f32 %v257, %v855
    %v888 = vmul.f32 %v256, %v856
    %v889 = vmul.f32 %v257, %v857
    %v890 = vmul.f32 %v256, %v858
    %v891 = vmul.f32 %v257, %v859
    %v892 = vmul.f32 %v37, %v828
    %v893 = vmul.f32 %v38, %v829
    %v894 = vmul.f32 %v37, %v830
    %v895 = vmul.f32 %v38, %v831
    %v896 = vmul.f32 %v37, %v832
    %v897 = vmul.f32 %v38, %v833
    %v898 = vmul.f32 %v37, %v834
    %v899 = vmul.f32 %v38, %v835
    %v900 = vmul.f32 %v37, %v836
    %v901 = vmul.f32 %v38, %v837
    %v902 = vmul.f32 %v37, %v838
    %v903 = vmul.f32 %v38, %v839
    %v904 = vmul.f32 %v37, %v840
    %v905 = vmul.f32 %v38, %v841
    %v906 = vmul.f32 %v37, %v842
    %v907 = vmul.f32 %v38, %v843
    %v908 = vmul.f32 %v37, %v844
    %v909 = vmul.f32 %v38, %v845
    %v910 = vmul.f32 %v37, %v846
    %v911 = vmul.f32 %v38, %v847
    %v912 = vmul.f32 %v37, %v848
    %v913 = vmul.f32 %v38, %v849
    %v914 = vmul.f32 %v37, %v850
    %v915 = vmul.f32 %v38, %v851
    %v916 = vmul.f32 %v37, %v852
    %v917 = vmul.f32 %v38, %v853
    %v918 = vmul.f32 %v37, %v854
    %v919 = vmul.f32 %v38, %v855
    %v920 = vmul.f32 %v37, %v856
    %v921 = vmul.f32 %v38, %v857
    %v922 = vmul.f32 %v37, %v858
    %v923 = vmul.f32 %v38, %v859
    %925 = vset.pattern.permute.xlu0 0
    %926 = vperm.xlu0 %925, %v50
    %v927 = vpop.permute.xlu0 %926
    %930 = vset.pattern.permute.xlu0 0
    %931 = vperm.xlu0 %930, %v51
    %v932 = vpop.permute.xlu0 %931
    %v934 = vmul.f32 %v256, %v927
    %v935 = vmul.f32 %v257, %v932
    %936 = vset.pattern.permute.xlu0 1
    %937 = vperm.xlu0 %936, %v50
    %v938 = vpop.permute.xlu0 %937
    %940 = vset.pattern.permute.xlu0 1
    %941 = vperm.xlu0 %940, %v51
    %v942 = vpop.permute.xlu0 %941
    %v944 = vmul.f32 %v37, %v938
    %v945 = vmul.f32 %v38, %v942
    %v947 = vsel %vm408, %v944, 0
    %v950 = vsel %vm408, %v945, 0
    %v953 = vsel %vm408, %v892, 0
    %v956 = vsel %vm408, %v893, 0
    %v959 = vsel %vm408, %v894, 0
    %v962 = vsel %vm408, %v895, 0
    %v965 = vsel %vm408, %v896, 0
    %v968 = vsel %vm408, %v897, 0
    %v971 = vsel %vm408, %v898, 0
    %v974 = vsel %vm408, %v899, 0
    %v977 = vsel %vm408, %v900, 0
    %v980 = vsel %vm408, %v901, 0
    %v983 = vsel %vm408, %v902, 0
    %v986 = vsel %vm408, %v903, 0
    %v989 = vsel %vm408, %v904, 0
    %v992 = vsel %vm408, %v905, 0
    %v995 = vsel %vm408, %v906, 0
    %v998 = vsel %vm408, %v907, 0
    %v1001 = vsel %vm408, %v908, 0
    %v1004 = vsel %vm408, %v909, 0
    %v1007 = vsel %vm408, %v910, 0
    %v1010 = vsel %vm408, %v911, 0
    %v1013 = vsel %vm408, %v912, 0
    %v1016 = vsel %vm408, %v913, 0
    %v1019 = vsel %vm408, %v914, 0
    %v1022 = vsel %vm408, %v915, 0
    %v1025 = vsel %vm408, %v916, 0
    %v1028 = vsel %vm408, %v917, 0
    %v1031 = vsel %vm408, %v918, 0
    %v1034 = vsel %vm408, %v919, 0
    %v1037 = vsel %vm408, %v920, 0
    %v1040 = vsel %vm408, %v921, 0
    %v1043 = vsel %vm408, %v922, 0
    %v1046 = vsel %vm408, %v923, 0
    %1048 = vmatprep.subr.mxu0 0.0
    %1049 = vmatpush1.xpose.msra.mxu0 %v953
    %1050 = vmatprep.subr.mxu0 0.0
    %1051 = vmatpush1.xpose.msra.mxu0 %v956
    %1052 = vmatprep.subr.mxu0 0.0
    %1053 = vmatpush1.xpose.msra.mxu0 %v959
    %1054 = vmatprep.subr.mxu0 0.0
    %1055 = vmatpush1.xpose.msra.mxu0 %v962
    %1056 = vmatprep.subr.mxu0 0.0
    %1057 = vmatpush1.xpose.msra.mxu0 %v965
    %1058 = vmatprep.subr.mxu0 0.0
    %1059 = vmatpush1.xpose.msra.mxu0 %v968
    %1060 = vmatprep.subr.mxu0 0.0
    %1061 = vmatpush1.xpose.msra.mxu0 %v971
    %1062 = vmatprep.subr.mxu0 0.0
    %1063 = vmatpush1.xpose.msra.mxu0 %v974
    %1064 = vmatprep.subr.mxu0 0.0
    %1065 = vmatpush1.xpose.msra.mxu0 %v977
    %1066 = vmatprep.subr.mxu0 0.0
    %1067 = vmatpush1.xpose.msra.mxu0 %v980
    %1068 = vmatprep.subr.mxu0 0.0
    %1069 = vmatpush1.xpose.msra.mxu0 %v983
    %1070 = vmatprep.subr.mxu0 0.0
    %1071 = vmatpush1.xpose.msra.mxu0 %v986
    %1072 = vmatprep.subr.mxu0 0.0
    %1073 = vmatpush1.xpose.msra.mxu0 %v989
    %1074 = vmatprep.subr.mxu0 0.0
    %1075 = vmatpush1.xpose.msra.mxu0 %v992
    %1076 = vmatprep.subr.mxu0 0.0
    %1077 = vmatpush1.xpose.msra.mxu0 %v995
    %1078 = vmatprep.subr.mxu0 0.0
    %1079 = vmatpush1.xpose.msra.mxu0 %v998
    %1080 = vmatprep.subr.mxu0 0.0
    %1081 = vmatpush1.xpose.msra.mxu0 %v1001
    %1082 = vmatprep.subr.mxu0 0.0
    %1083 = vmatpush1.xpose.msra.mxu0 %v1004
    %1084 = vmatprep.subr.mxu0 0.0
    %1085 = vmatpush1.xpose.msra.mxu0 %v1007
    %1086 = vmatprep.subr.mxu0 0.0
    %1087 = vmatpush1.xpose.msra.mxu0 %v1010
    %1088 = vmatprep.subr.mxu0 0.0
    %1089 = vmatpush1.xpose.msra.mxu0 %v1013
    %1090 = vmatprep.subr.mxu0 0.0
    %1091 = vmatpush1.xpose.msra.mxu0 %v1016
    %1092 = vmatprep.subr.mxu0 0.0
    %1093 = vmatpush1.xpose.msra.mxu0 %v1019
    %1094 = vmatprep.subr.mxu0 0.0
    %1095 = vmatpush1.xpose.msra.mxu0 %v1022
    %1096 = vmatprep.subr.mxu0 0.0
    %1097 = vmatpush1.xpose.msra.mxu0 %v1025
    %1098 = vmatprep.subr.mxu0 0.0
    %1099 = vmatpush1.xpose.msra.mxu0 %v1028
    %1100 = vmatprep.subr.mxu0 0.0
    %1101 = vmatpush1.xpose.msra.mxu0 %v1031
    %1102 = vmatprep.subr.mxu0 0.0
    %1103 = vmatpush1.xpose.msra.mxu0 %v1034
    %1104 = vmatprep.subr.mxu0 0.0
    %1105 = vmatpush1.xpose.msra.mxu0 %v1037
    %1106 = vmatprep.subr.mxu0 0.0
    %1107 = vmatpush1.xpose.msra.mxu0 %v1040
    %1108 = vmatprep.subr.mxu0 0.0
    %1109 = vmatpush1.xpose.msra.mxu0 %v1043
    %1110 = vmatprep.subr.mxu0 0.0
    %1111 = vmatpush1.xpose.msra.mxu0 %v1046
    %1112 = vmatprep.mubr.f32.mxu0 0.0
    %1113 = vmatmul.mubr.f32.gmra.mrb[0].mxu0 %v947
    %v1114 = vpop.f32.mrb[0].mxu0
    %v1115 = vadd.f32 0.0, %v1114
    %v1116 = vpop.f32.mrb[0].mxu0
    %v1117 = vadd.f32 0.0, %v1116
    %1118 = vmatprep.mubr.f32.mxu0 0.0
    %1119 = vmatmul.mubr.f32.gmra.mrb[0].mxu0 %v950
    %v1120 = vpop.f32.mrb[0].mxu0
    %v1121 = vadd.f32 0.0, %v1120
    %v1122 = vpop.f32.mrb[0].mxu0
    %v1123 = vadd.f32 0.0, %v1122
    %1124 = vdwg.mxu0
    %v1126 = vsel %vm408, %v934, 0
    %v1129 = vsel %vm408, %v935, 0
    %v1132 = vsel %vm408, %v860, 0
    %v1135 = vsel %vm408, %v861, 0
    %v1138 = vsel %vm408, %v862, 0
    %v1141 = vsel %vm408, %v863, 0
    %v1144 = vsel %vm408, %v864, 0
    %v1147 = vsel %vm408, %v865, 0
    %v1150 = vsel %vm408, %v866, 0
    %v1153 = vsel %vm408, %v867, 0
    %v1156 = vsel %vm408, %v868, 0
    %v1159 = vsel %vm408, %v869, 0
    %v1162 = vsel %vm408, %v870, 0
    %v1165 = vsel %vm408, %v871, 0
    %v1168 = vsel %vm408, %v872, 0
    %v1171 = vsel %vm408, %v873, 0
    %v1174 = vsel %vm408, %v874, 0
    %v1177 = vsel %vm408, %v875, 0
    %v1180 = vsel %vm408, %v876, 0
    %v1183 = vsel %vm408, %v877, 0
    %v1186 = vsel %vm408, %v878, 0
    %v1189 = vsel %vm408, %v879, 0
    %v1192 = vsel %vm408, %v880, 0
    %v1195 = vsel %vm408, %v881, 0
    %v1198 = vsel %vm408, %v882, 0
    %v1201 = vsel %vm408, %v883, 0
    %v1204 = vsel %vm408, %v884, 0
    %v1207 = vsel %vm408, %v885, 0
    %v1210 = vsel %vm408, %v886, 0
    %v1213 = vsel %vm408, %v887, 0
    %v1216 = vsel %vm408, %v888, 0
    %v1219 = vsel %vm408, %v889, 0
    %v1222 = vsel %vm408, %v890, 0
    %v1225 = vsel %vm408, %v891, 0
    %1227 = vmatprep.subr.mxu0 0.0
    %1228 = vmatpush1.xpose.msra.mxu0 %v1132
    %1229 = vmatprep.subr.mxu0 0.0
    %1230 = vmatpush1.xpose.msra.mxu0 %v1135
    %1231 = vmatprep.subr.mxu0 0.0
    %1232 = vmatpush1.xpose.msra.mxu0 %v1138
    %1233 = vmatprep.subr.mxu0 0.0
    %1234 = vmatpush1.xpose.msra.mxu0 %v1141
    %1235 = vmatprep.subr.mxu0 0.0
    %1236 = vmatpush1.xpose.msra.mxu0 %v1144
    %1237 = vmatprep.subr.mxu0 0.0
    %1238 = vmatpush1.xpose.msra.mxu0 %v1147
    %1239 = vmatprep.subr.mxu0 0.0
    %1240 = vmatpush1.xpose.msra.mxu0 %v1150
    %1241 = vmatprep.subr.mxu0 0.0
    %1242 = vmatpush1.xpose.msra.mxu0 %v1153
    %1243 = vmatprep.subr.mxu0 0.0
    %1244 = vmatpush1.xpose.msra.mxu0 %v1156
    %1245 = vmatprep.subr.mxu0 0.0
    %1246 = vmatpush1.xpose.msra.mxu0 %v1159
    %1247 = vmatprep.subr.mxu0 0.0
    %1248 = vmatpush1.xpose.msra.mxu0 %v1162
    %1249 = vmatprep.subr.mxu0 0.0
    %1250 = vmatpush1.xpose.msra.mxu0 %v1165
    %1251 = vmatprep.subr.mxu0 0.0
    %1252 = vmatpush1.xpose.msra.mxu0 %v1168
    %1253 = vmatprep.subr.mxu0 0.0
    %1254 = vmatpush1.xpose.msra.mxu0 %v1171
    %1255 = vmatprep.subr.mxu0 0.0
    %1256 = vmatpush1.xpose.msra.mxu0 %v1174
    %1257 = vmatprep.subr.mxu0 0.0
    %1258 = vmatpush1.xpose.msra.mxu0 %v1177
    %1259 = vmatprep.subr.mxu0 0.0
    %1260 = vmatpush1.xpose.msra.mxu0 %v1180
    %1261 = vmatprep.subr.mxu0 0.0
    %1262 = vmatpush1.xpose.msra.mxu0 %v1183
    %1263 = vmatprep.subr.mxu0 0.0
    %1264 = vmatpush1.xpose.msra.mxu0 %v1186
    %1265 = vmatprep.subr.mxu0 0.0
    %1266 = vmatpush1.xpose.msra.mxu0 %v1189
    %1267 = vmatprep.subr.mxu0 0.0
    %1268 = vmatpush1.xpose.msra.mxu0 %v1192
    %1269 = vmatprep.subr.mxu0 0.0
    %1270 = vmatpush1.xpose.msra.mxu0 %v1195
    %1271 = vmatprep.subr.mxu0 0.0
    %1272 = vmatpush1.xpose.msra.mxu0 %v1198
    %1273 = vmatprep.subr.mxu0 0.0
    %1274 = vmatpush1.xpose.msra.mxu0 %v1201
    %1275 = vmatprep.subr.mxu0 0.0
    %1276 = vmatpush1.xpose.msra.mxu0 %v1204
    %1277 = vmatprep.subr.mxu0 0.0
    %1278 = vmatpush1.xpose.msra.mxu0 %v1207
    %1279 = vmatprep.subr.mxu0 0.0
    %1280 = vmatpush1.xpose.msra.mxu0 %v1210
    %1281 = vmatprep.subr.mxu0 0.0
    %1282 = vmatpush1.xpose.msra.mxu0 %v1213
    %1283 = vmatprep.subr.mxu0 0.0
    %1284 = vmatpush1.xpose.msra.mxu0 %v1216
    %1285 = vmatprep.subr.mxu0 0.0
    %1286 = vmatpush1.xpose.msra.mxu0 %v1219
    %1287 = vmatprep.subr.mxu0 0.0
    %1288 = vmatpush1.xpose.msra.mxu0 %v1222
    %1289 = vmatprep.subr.mxu0 0.0
    %1290 = vmatpush1.xpose.msra.mxu0 %v1225
    %1291 = vmatprep.mubr.f32.mxu0 0.0
    %1292 = vmatmul.mubr.f32.gmra.mrb[0].mxu0 %v1126
    %v1293 = vpop.f32.mrb[0].mxu0
    %v1294 = vadd.f32 %v1115, %v1293
    %v1295 = vpop.f32.mrb[0].mxu0
    %v1296 = vadd.f32 %v1117, %v1295
    %1297 = vmatprep.mubr.f32.mxu0 0.0
    %1298 = vmatmul.mubr.f32.gmra.mrb[0].mxu0 %v1129
    %v1299 = vpop.f32.mrb[0].mxu0
    %v1300 = vadd.f32 %v1121, %v1299
    %v1301 = vpop.f32.mrb[0].mxu0
    %v1302 = vadd.f32 %v1123, %v1301
    %1303 = vdwg.mxu0
    %v1304 = vmul.f32 %v1294, 1.442695
    %v1305 = vpow.pop %v1304
    %v1306 = vmul.f32 %v1296, 1.442695
    %v1307 = vpow.pop %v1306
    %v1308 = vmul.f32 %v1300, 1.442695
    %v1309 = vpow.pop %v1308
    %v1310 = vmul.f32 %v1302, 1.442695
    %v1311 = vpow.pop %v1310
    %1312 = vmatprep.subr.mxu0 0.0
    %1313 = vmatpush1.msra.mxu0 %v828
    %1314 = vmatprep.subr.mxu0 0.0
    %1315 = vmatpush1.msra.mxu0 %v829
    %1316 = vmatprep.subr.mxu0 0.0
    %1317 = vmatpush1.msra.mxu0 %v830
    %1318 = vmatprep.subr.mxu0 0.0
    %1319 = vmatpush1.msra.mxu0 %v831
    %1320 = vmatprep.subr.mxu0 0.0
    %1321 = vmatpush1.msra.mxu0 %v832
    %1322 = vmatprep.subr.mxu0 0.0
    %1323 = vmatpush1.msra.mxu0 %v833
    %1324 = vmatprep.subr.mxu0 0.0
    %1325 = vmatpush1.msra.mxu0 %v834
    %1326 = vmatprep.subr.mxu0 0.0
    %1327 = vmatpush1.msra.mxu0 %v835
    %1328 = vmatprep.subr.mxu0 0.0
    %1329 = vmatpush1.msra.mxu0 %v836
    %1330 = vmatprep.subr.mxu0 0.0
    %1331 = vmatpush1.msra.mxu0 %v837
    %1332 = vmatprep.subr.mxu0 0.0
    %1333 = vmatpush1.msra.mxu0 %v838
    %1334 = vmatprep.subr.mxu0 0.0
    %1335 = vmatpush1.msra.mxu0 %v839
    %1336 = vmatprep.subr.mxu0 0.0
    %1337 = vmatpush1.msra.mxu0 %v840
    %1338 = vmatprep.subr.mxu0 0.0
    %1339 = vmatpush1.msra.mxu0 %v841
    %1340 = vmatprep.subr.mxu0 0.0
    %1341 = vmatpush1.msra.mxu0 %v842
    %1342 = vmatprep.subr.mxu0 0.0
    %1343 = vmatpush1.msra.mxu0 %v843
    %1344 = vmatprep.subr.mxu0 0.0
    %1345 = vmatpush1.msra.mxu0 %v844
    %1346 = vmatprep.subr.mxu0 0.0
    %1347 = vmatpush1.msra.mxu0 %v845
    %1348 = vmatprep.subr.mxu0 0.0
    %1349 = vmatpush1.msra.mxu0 %v846
    %1350 = vmatprep.subr.mxu0 0.0
    %1351 = vmatpush1.msra.mxu0 %v847
    %1352 = vmatprep.subr.mxu0 0.0
    %1353 = vmatpush1.msra.mxu0 %v848
    %1354 = vmatprep.subr.mxu0 0.0
    %1355 = vmatpush1.msra.mxu0 %v849
    %1356 = vmatprep.subr.mxu0 0.0
    %1357 = vmatpush1.msra.mxu0 %v850
    %1358 = vmatprep.subr.mxu0 0.0
    %1359 = vmatpush1.msra.mxu0 %v851
    %1360 = vmatprep.subr.mxu0 0.0
    %1361 = vmatpush1.msra.mxu0 %v852
    %1362 = vmatprep.subr.mxu0 0.0
    %1363 = vmatpush1.msra.mxu0 %v853
    %1364 = vmatprep.subr.mxu0 0.0
    %1365 = vmatpush1.msra.mxu0 %v854
    %1366 = vmatprep.subr.mxu0 0.0
    %1367 = vmatpush1.msra.mxu0 %v855
    %1368 = vmatprep.subr.mxu0 0.0
    %1369 = vmatpush1.msra.mxu0 %v856
    %1370 = vmatprep.subr.mxu0 0.0
    %1371 = vmatpush1.msra.mxu0 %v857
    %1372 = vmatprep.subr.mxu0 0.0
    %1373 = vmatpush1.msra.mxu0 %v858
    %1374 = vmatprep.subr.mxu0 0.0
    %1375 = vmatpush1.msra.mxu0 %v859
    %1376 = vmatprep.mubr.f32.mxu0 %v1307
    %1377 = vmatmul.mubr.f32.gmra.mrb[0].mxu0 %v1305
    %v1378 = vpop.f32.mrb[0].mxu0
    %v1379 = vadd.f32 0.0, %v1378
    %v1380 = vpop.f32.mrb[0].mxu0
    %1381 = vmatprep.mubr.f32.mxu0 %v1311
    %1382 = vmatmul.mubr.f32.gmra.mrb[0].mxu0 %v1309
    %v1383 = vpop.f32.mrb[0].mxu0
    %v1384 = vadd.f32 0.0, %v1383
    %v1385 = vpop.f32.mrb[0].mxu0
    %1386 = vdwg.mxu0
    %v1387 = vmul.f32 %v39, %v828
    %v1388 = vmul.f32 %v40, %v829
    %v1389 = vmul.f32 %v39, %v830
    %v1390 = vmul.f32 %v40, %v831
    %v1391 = vmul.f32 %v39, %v832
    %v1392 = vmul.f32 %v40, %v833
    %v1393 = vmul.f32 %v39, %v834
    %v1394 = vmul.f32 %v40, %v835
    %v1395 = vmul.f32 %v39, %v836
    %v1396 = vmul.f32 %v40, %v837
    %v1397 = vmul.f32 %v39, %v838
    %v1398 = vmul.f32 %v40, %v839
    %v1399 = vmul.f32 %v39, %v840
    %v1400 = vmul.f32 %v40, %v841
    %v1401 = vmul.f32 %v39, %v842
    %v1402 = vmul.f32 %v40, %v843
    %v1403 = vmul.f32 %v39, %v844
    %v1404 = vmul.f32 %v40, %v845
    %v1405 = vmul.f32 %v39, %v846
    %v1406 = vmul.f32 %v40, %v847
    %v1407 = vmul.f32 %v39, %v848
    %v1408 = vmul.f32 %v40, %v849
    %v1409 = vmul.f32 %v39, %v850
    %v1410 = vmul.f32 %v40, %v851
    %v1411 = vmul.f32 %v39, %v852
    %v1412 = vmul.f32 %v40, %v853
    %v1413 = vmul.f32 %v39, %v854
    %v1414 = vmul.f32 %v40, %v855
    %v1415 = vmul.f32 %v39, %v856
    %v1416 = vmul.f32 %v40, %v857
    %v1417 = vmul.f32 %v39, %v858
    %v1418 = vmul.f32 %v40, %v859
    %1419 = vmatprep.subr.mxu0 0.0
    %1420 = vmatpush1.msra.mxu0 %v1387
    %1421 = vmatprep.subr.mxu0 0.0
    %1422 = vmatpush1.msra.mxu0 %v1388
    %1423 = vmatprep.subr.mxu0 0.0
    %1424 = vmatpush1.msra.mxu0 %v1389
    %1425 = vmatprep.subr.mxu0 0.0
    %1426 = vmatpush1.msra.mxu0 %v1390
    %1427 = vmatprep.subr.mxu0 0.0
    %1428 = vmatpush1.msra.mxu0 %v1391
    %1429 = vmatprep.subr.mxu0 0.0
    %1430 = vmatpush1.msra.mxu0 %v1392
    %1431 = vmatprep.subr.mxu0 0.0
    %1432 = vmatpush1.msra.mxu0 %v1393
    %1433 = vmatprep.subr.mxu0 0.0
    %1434 = vmatpush1.msra.mxu0 %v1394
    %1435 = vmatprep.subr.mxu0 0.0
    %1436 = vmatpush1.msra.mxu0 %v1395
    %1437 = vmatprep.subr.mxu0 0.0
    %1438 = vmatpush1.msra.mxu0 %v1396
    %1439 = vmatprep.subr.mxu0 0.0
    %1440 = vmatpush1.msra.mxu0 %v1397
    %1441 = vmatprep.subr.mxu0 0.0
    %1442 = vmatpush1.msra.mxu0 %v1398
    %1443 = vmatprep.subr.mxu0 0.0
    %1444 = vmatpush1.msra.mxu0 %v1399
    %1445 = vmatprep.subr.mxu0 0.0
    %1446 = vmatpush1.msra.mxu0 %v1400
    %1447 = vmatprep.subr.mxu0 0.0
    %1448 = vmatpush1.msra.mxu0 %v1401
    %1449 = vmatprep.subr.mxu0 0.0
    %1450 = vmatpush1.msra.mxu0 %v1402
    %1451 = vmatprep.subr.mxu0 0.0
    %1452 = vmatpush1.msra.mxu0 %v1403
    %1453 = vmatprep.subr.mxu0 0.0
    %1454 = vmatpush1.msra.mxu0 %v1404
    %1455 = vmatprep.subr.mxu0 0.0
    %1456 = vmatpush1.msra.mxu0 %v1405
    %1457 = vmatprep.subr.mxu0 0.0
    %1458 = vmatpush1.msra.mxu0 %v1406
    %1459 = vmatprep.subr.mxu0 0.0
    %1460 = vmatpush1.msra.mxu0 %v1407
    %1461 = vmatprep.subr.mxu0 0.0
    %1462 = vmatpush1.msra.mxu0 %v1408
    %1463 = vmatprep.subr.mxu0 0.0
    %1464 = vmatpush1.msra.mxu0 %v1409
    %1465 = vmatprep.subr.mxu0 0.0
    %1466 = vmatpush1.msra.mxu0 %v1410
    %1467 = vmatprep.subr.mxu0 0.0
    %1468 = vmatpush1.msra.mxu0 %v1411
    %1469 = vmatprep.subr.mxu0 0.0
    %1470 = vmatpush1.msra.mxu0 %v1412
    %1471 = vmatprep.subr.mxu0 0.0
    %1472 = vmatpush1.msra.mxu0 %v1413
    %1473 = vmatprep.subr.mxu0 0.0
    %1474 = vmatpush1.msra.mxu0 %v1414
    %1475 = vmatprep.subr.mxu0 0.0
    %1476 = vmatpush1.msra.mxu0 %v1415
    %1477 = vmatprep.subr.mxu0 0.0
    %1478 = vmatpush1.msra.mxu0 %v1416
    %1479 = vmatprep.subr.mxu0 0.0
    %1480 = vmatpush1.msra.mxu0 %v1417
    %1481 = vmatprep.subr.mxu0 0.0
    %1482 = vmatpush1.msra.mxu0 %v1418
    %1483 = vmatprep.mubr.f32.mxu0 %v1307
    %1484 = vmatmul.mubr.f32.gmra.mrb[0].mxu0 %v1305
    %v1485 = vpop.f32.mrb[0].mxu0
    %v1486 = vadd.f32 0.0, %v1485
    %v1487 = vpop.f32.mrb[0].mxu0
    %1488 = vmatprep.mubr.f32.mxu0 %v1311
    %1489 = vmatmul.mubr.f32.gmra.mrb[0].mxu0 %v1309
    %v1490 = vpop.f32.mrb[0].mxu0
    %v1491 = vadd.f32 0.0, %v1490
    %v1492 = vpop.f32.mrb[0].mxu0
    %1493 = vdwg.mxu0
    %v1494 = vrcp.pop %v1379
    %v1495 = vrcp.pop %v1384
    %v1496 = vmul.f32 %v1486, %v1494
    %v1497 = vmul.f32 %v1491, %v1495
    %v1498 = vadd.f32 %v1496, %v589
    %v1499 = vadd.f32 %v1497, %v594
    %v1500 = vmul.f32 %v1498, 0.5
    %v1501 = vmul.f32 %v1499, 0.5
    %1502 = vst.msk [vmem:[#allocation5] sm:$0xff] %vm408, %v1500
    %1503 = vst.msk [vmem:[#allocation5 + $0x8] sm:$0xff] %vm408, %v1501
    // Predicated region
    $region26: #{tpu_custom_call.1} parent=1 // pred_check
      _
    $region27: #{tpu_custom_call.1} parent=1 // pred_check_branch
      %1505 = sbr.rel (0) target = $region29
    $region28: #{tpu_custom_call.1} parent=1 // pred_region
      %s1507 = ssub.s32 256, 256
      %1508 = vsyncadd [#allocation4], %s1507
      %s1509 = sshll.u32 [#allocation5], 4
      %s1510 = int_to_ptr.vmem [resolvable:$true] %s1509
      %1515 = dma.vmem_to_hbm [thread:$0]  %s1510, 256, %s5, [#allocation4], 128, 128, 8
    $region29: #{tpu_custom_call.1} parent=1 // pred_fallthru
      _
    // Predicated region
    $region30: #{tpu_custom_call.1} parent=1 // pred_check
      _
    $region31: #{tpu_custom_call.1} parent=1 // pred_check_branch
      %1517 = sbr.rel (0) target = $region33
    $region32: #{tpu_custom_call.1} parent=1 // pred_region
      %1518 = dma.done [#allocation4], 256
    $region33: #{tpu_custom_call.1} parent=1 // pred_fallthru
      _
    %1519 = vsyncpa [#allocation3], 1
    %1520 = vsyncpa [#allocation4], 1

</llo_original>
